<compile_context>
chip_gen: v5e
topology: v5e:2x2
jax: 0.10.0
libtpu: 0.0.40
codegen_flags: <defaults>
</compile_context>

<pallas_src>
import functools

import jax
import jax.numpy as jnp
from jax.experimental import pallas as pl
from jax.experimental.pallas import tpu as pltpu


def subtyping_kernel(x_ref, batch_ref,
                     w_head_ref, b_head_ref,
                     w_a_ref, b_a_ref,
                     w_b_ref, b_b_ref,
                     w_c_ref, b_c_ref,
                     w_cls_ref, b_cls_ref,
                     out_ref,
                     m_ref, l_ref, acc_ref,
                     *, total_nodes):
    step = pl.program_id(0)
    last = pl.num_programs(0) - 1
    G = out_ref.shape[0]
    tn = x_ref.shape[0]
    cdt = w_head_ref.dtype                      # MXU compute dtype (bf16)
    NEG = jnp.float32(-1e30)

    # ---- init per-graph online-softmax accumulators (first node tile) ----
    @pl.when(step == 0)
    def _init():
        m_ref[...] = jnp.full(m_ref.shape, NEG, jnp.float32)
        l_ref[...] = jnp.zeros(l_ref.shape, jnp.float32)
        acc_ref[...] = jnp.zeros(acc_ref.shape, jnp.float32)

    # ---- head: Linear + ReLU (Dropout = identity at inference) ----
    # x arrives as f32 from HBM; cast to the MXU dtype in-VMEM (no wrapper pass).
    x_c = x_ref[...].astype(cdt)
    h = jnp.maximum(
        jnp.dot(x_c, w_head_ref[...],
                preferred_element_type=jnp.float32) + b_head_ref[...],
        0.0)                                                            # [tn, E] f32

    # Zero the tail rows of the (only possibly partial) last tile so that
    # garbage/NaN beyond N cannot reach the pooling matmul (0 * NaN = NaN).
    if total_nodes % tn != 0:
        node_ids = jax.lax.broadcasted_iota(jnp.int32, (tn, 1), 0) + step * tn
        h = jnp.where(node_ids < total_nodes, h, 0.0)

    h_c = h.astype(cdt)          # single f32->bf16 pass, reused for 3 matmuls

    # ---- Attn_Net_Gated: a = tanh(h Wa + ba), b = sigmoid(h Wb + bb) ----
    z_a = jnp.dot(h_c, w_a_ref[...],
                  preferred_element_type=jnp.float32) + b_a_ref[...]    # [tn, D]
    z_b = jnp.dot(h_c, w_b_ref[...],
                  preferred_element_type=jnp.float32) + b_b_ref[...]    # [tn, D]
    ab = jnp.tanh(z_a) * jax.nn.sigmoid(z_b)                            # [tn, D] f32

    # gate as a lane-oriented row vector: [1, D] x [tn, D]^T -> [1, tn]
    gate_row = jax.lax.dot_general(
        w_c_ref[...], ab.astype(cdt),
        dimension_numbers=(((1,), (1,)), ((), ())),
        preferred_element_type=jnp.float32) + b_c_ref[...]              # [1, tn]

    # ---- [G, tn] membership mask: graphs on sublanes, nodes on lanes ----
    graph_ids = jax.lax.broadcasted_iota(jnp.int32, (G, tn), 0)         # [G, tn]
    mask = batch_ref[...] == graph_ids                                  # [G, tn]

    # ---- online (flash-style) segment softmax + pooled accumulation ----
    s = jnp.where(mask, gate_row, NEG)                                  # [G, tn]
    m_prev = m_ref[...]                                                 # [G, 1]
    m_new = jnp.maximum(m_prev, jnp.max(s, axis=1, keepdims=True))      # [G, 1]
    corr = jnp.exp(m_prev - m_new)                                      # [G, 1]
    p = jnp.where(mask, jnp.exp(s - m_new), 0.0)                        # [G, tn]

    l_ref[...] = corr * l_ref[...] + jnp.sum(p, axis=1, keepdims=True)
    acc_ref[...] = corr * acc_ref[...] + jnp.dot(
        p.astype(cdt), h_c, preferred_element_type=jnp.float32)         # [G, E]
    m_ref[...] = m_new

    # ---- finalize: normalize pooled features and run the classifier ----
    @pl.when(step == last)
    def _final():
        l = l_ref[...]
        inv = 1.0 / jnp.maximum(l, jnp.float32(1e-30))   # exact; [G,1] only
        inv = jnp.where(l > 0.0, inv, 0.0)               # empty graphs -> 0 row
        pooled = acc_ref[...] * inv                                     # [G, E]
        out_ref[...] = (jnp.dot(pooled.astype(cdt), w_cls_ref[...],
                                preferred_element_type=jnp.float32)
                        + b_cls_ref[...]).astype(out_ref.dtype)         # [G, T]


def subtyping_forward(x, batch, params, num_graphs, *,
                      node_tile=512, compute_dtype=jnp.bfloat16):
    """Fused SubtypingGraphArch forward. `batch` maps each node to a graph id in
    [0, num_graphs); ids outside that range are ignored (contribute nothing)."""
    N, F = x.shape
    E = params["w_head"].shape[1]
    D = params["w_a"].shape[1]
    T = params["w_cls"].shape[1]

    assert node_tile % 128 == 0, "node_tile must be lane-aligned (multiple of 128)"
    n_tiles = -(-N // node_tile)
    N_pad = n_tiles * node_tile

    # Only `batch` (tiny) is padded; x is passed through untouched as f32.
    batch = batch.astype(jnp.int32)
    if N_pad != N:
        batch = jnp.pad(batch, (0, N_pad - N), constant_values=-1)
    batch2d = batch.reshape(1, N_pad)

    cdt = compute_dtype
    w_head = params["w_head"].astype(cdt)
    b_head = params["b_head"].astype(jnp.float32)
    w_a = params["w_a"].astype(cdt)
    b_a = params["b_a"].astype(jnp.float32)
    w_b = params["w_b"].astype(cdt)
    b_b = params["b_b"].astype(jnp.float32)
    w_c_row = params["w_c"].T.astype(cdt)                  # [1, D]
    b_c = params["b_c"].astype(jnp.float32)                # [1, 1]
    w_cls = params["w_cls"].astype(cdt)
    b_cls = params["b_cls"].astype(jnp.float32)

    grid = (n_tiles,)
    in_specs = [
        pl.BlockSpec((node_tile, F), lambda i: (i, 0)),    # x (f32, node-tiled)
        pl.BlockSpec((1, node_tile), lambda i: (0, i)),    # batch ids (tiled)
        pl.BlockSpec((F, E), lambda i: (0, 0)),            # w_head (resident)
        pl.BlockSpec((1, E), lambda i: (0, 0)),            # b_head
        pl.BlockSpec((E, D), lambda i: (0, 0)),            # w_a
        pl.BlockSpec((1, D), lambda i: (0, 0)),            # b_a
        pl.BlockSpec((E, D), lambda i: (0, 0)),            # w_b
        pl.BlockSpec((1, D), lambda i: (0, 0)),            # b_b
        pl.BlockSpec((1, D), lambda i: (0, 0)),            # w_c (row)
        pl.BlockSpec((1, 1), lambda i: (0, 0)),            # b_c
        pl.BlockSpec((E, T), lambda i: (0, 0)),            # w_cls
        pl.BlockSpec((1, T), lambda i: (0, 0)),            # b_cls
    ]
    out_specs = pl.BlockSpec((num_graphs, T), lambda i: (0, 0))
    scratch_shapes = [
        pltpu.VMEM((num_graphs, 1), jnp.float32),          # running max m
        pltpu.VMEM((num_graphs, 1), jnp.float32),          # running denom l
        pltpu.VMEM((num_graphs, E), jnp.float32),          # running weighted sum
    ]

    kernel = functools.partial(subtyping_kernel, total_nodes=N)

    return pl.pallas_call(
        kernel,
        out_shape=jax.ShapeDtypeStruct((num_graphs, T), jnp.float32),
        grid_spec=pltpu.PrefetchScalarGridSpec(
            num_scalar_prefetch=0,
            grid=grid,
            in_specs=in_specs,
            out_specs=out_specs,
            scratch_shapes=scratch_shapes),
        compiler_params=pltpu.CompilerParams(
            # node axis carries the online-softmax accumulator -> "arbitrary"
            dimension_semantics=("arbitrary",),
            vmem_limit_bytes=32 * 1024 * 1024),
    )(x, batch2d, w_head, b_head, w_a, b_a, w_b, b_b, w_c_row, b_c, w_cls, b_cls)


def init_params(key, dim_features, layers, dim_target):
    """nn.Linear-style init (uniform +-1/sqrt(fan_in)); weights stored as [in, out]."""
    E = layers[0]          # head output dim == L of gate_nn == classifier input
    D = layers[-1]         # D of gate_nn

    def lin(k, fan_in, fan_out):
        kw, kb = jax.random.split(k)
        s = 1.0 / jnp.sqrt(jnp.float32(fan_in))
        w = jax.random.uniform(kw, (fan_in, fan_out), jnp.float32, -s, s)
        b = jax.random.uniform(kb, (1, fan_out), jnp.float32, -s, s)
        return w, b

    k = jax.random.split(key, 5)
    w_head, b_head = lin(k[0], dim_features, E)
    w_a, b_a = lin(k[1], E, D)
    w_b, b_b = lin(k[2], E, D)
    w_c, b_c = lin(k[3], D, 1)
    w_cls, b_cls = lin(k[4], E, dim_target)
    return dict(w_head=w_head, b_head=b_head,
                w_a=w_a, b_a=b_a, w_b=w_b, b_b=b_b,
                w_c=w_c, b_c=b_c, w_cls=w_cls, b_cls=b_cls)


def reference_forward(x, batch, params, num_graphs):
    """Pure-JAX f32 reference of the PyTorch forward (inference mode)."""
    h = jax.nn.relu(x @ params["w_head"] + params["b_head"])
    a = jnp.tanh(h @ params["w_a"] + params["b_a"])
    b = jax.nn.sigmoid(h @ params["w_b"] + params["b_b"])
    gate = ((a * b) @ params["w_c"] + params["b_c"])[:, 0]
    seg_max = jax.ops.segment_max(gate, batch, num_segments=num_graphs)
    e = jnp.exp(gate - seg_max[batch])
    seg_sum = jax.ops.segment_sum(e, batch, num_segments=num_graphs)
    alpha = e / seg_sum[batch]
    pooled = jax.ops.segment_sum(alpha[:, None] * h, batch,
                                 num_segments=num_graphs)
    return pooled @ params["w_cls"] + params["b_cls"]


if __name__ == "__main__":
    # Small config consistent with the module (real configs: F~1024, E~512, D~256).
    N = 384             # total nodes in the batch (not a tile multiple -> tail path)
    dim_features = 64   # node feature dim
    layers = [32, 32]   # embedding dims (head out E / gate D)
    dim_target = 4      # number of subtypes
    num_graphs = 8      # graphs in the batch
    node_tile = 256     # 2 tiles, last one partial (exercises online accumulation)

    key = jax.random.PRNGKey(0)
    kx, kp = jax.random.split(key)
    x = jax.random.normal(kx, (N, dim_features), jnp.float32)
    batch = jnp.repeat(jnp.arange(num_graphs, dtype=jnp.int32),
                       N // num_graphs)

    params = init_params(kp, dim_features, layers, dim_target)

    out = subtyping_forward(x, batch, params, num_graphs,
                            node_tile=node_tile, compute_dtype=jnp.bfloat16)
    out = jax.block_until_ready(out)

    ref = reference_forward(x, batch, params, num_graphs)
    assert out.shape == (num_graphs, dim_target)
    # bf16 matmul operands in the kernel vs f32 reference -> loose tolerance.
    assert jnp.allclose(out, ref, rtol=5e-2, atol=5e-2), (
        float(jnp.max(jnp.abs(out - ref))), out, ref)

    print("KERNEL_OK")
</pallas_src>

<mosaic_0001>
module attributes {stable_mosaic.version = 11 : i64} {
  func.func @subtyping_kernel(%arg0: i32, %arg1: memref<256x64xf32, #tpu.memory_space<vmem>>, %arg2: memref<1x256xi32, #tpu.memory_space<vmem>>, %arg3: memref<64x32xbf16, #tpu.memory_space<vmem>>, %arg4: memref<1x32xf32, #tpu.memory_space<vmem>>, %arg5: memref<32x32xbf16, #tpu.memory_space<vmem>>, %arg6: memref<1x32xf32, #tpu.memory_space<vmem>>, %arg7: memref<32x32xbf16, #tpu.memory_space<vmem>>, %arg8: memref<1x32xf32, #tpu.memory_space<vmem>>, %arg9: memref<1x32xbf16, #tpu.memory_space<vmem>>, %arg10: memref<1x1xf32, #tpu.memory_space<vmem>>, %arg11: memref<32x4xbf16, #tpu.memory_space<vmem>>, %arg12: memref<1x4xf32, #tpu.memory_space<vmem>>, %arg13: memref<8x4xf32, #tpu.memory_space<vmem>>, %arg14: memref<8x1xf32, #tpu.memory_space<vmem>>, %arg15: memref<8x1xf32, #tpu.memory_space<vmem>>, %arg16: memref<8x32xf32, #tpu.memory_space<vmem>>) attributes {dimension_semantics = [#tpu.dimension_semantics<arbitrary>], iteration_bounds = array<i64: 2>, scalar_prefetch = 0 : i64, scratch_operands = 3 : i64, tpu.core_type = #tpu.core_type<tc>, window_params = [{transform_indices = @transform_0, window_bounds = array<i64: 256, 64>}, {transform_indices = @transform_1, window_bounds = array<i64: 1, 256>}, {pipeline_mode = #tpu.pipeline_mode<synchronous>, transform_indices = @transform_2, window_bounds = array<i64: 64, 32>}, {pipeline_mode = #tpu.pipeline_mode<synchronous>, transform_indices = @transform_3, window_bounds = array<i64: 1, 32>}, {pipeline_mode = #tpu.pipeline_mode<synchronous>, transform_indices = @transform_4, window_bounds = array<i64: 32, 32>}, {pipeline_mode = #tpu.pipeline_mode<synchronous>, transform_indices = @transform_5, window_bounds = array<i64: 1, 32>}, {pipeline_mode = #tpu.pipeline_mode<synchronous>, transform_indices = @transform_6, window_bounds = array<i64: 32, 32>}, {pipeline_mode = #tpu.pipeline_mode<synchronous>, transform_indices = @transform_7, window_bounds = array<i64: 1, 32>}, {pipeline_mode = #tpu.pipeline_mode<synchronous>, transform_indices = @transform_8, window_bounds = array<i64: 1, 32>}, {pipeline_mode = #tpu.pipeline_mode<synchronous>, transform_indices = @transform_9, window_bounds = array<i64: 1, 1>}, {pipeline_mode = #tpu.pipeline_mode<synchronous>, transform_indices = @transform_10, window_bounds = array<i64: 32, 4>}, {pipeline_mode = #tpu.pipeline_mode<synchronous>, transform_indices = @transform_11, window_bounds = array<i64: 1, 4>}, {pipeline_mode = #tpu.pipeline_mode<synchronous>, transform_indices = @transform_12, window_bounds = array<i64: 8, 4>}]} {
    %c0_i32 = arith.constant 0 : i32
    %0 = arith.cmpi eq, %arg0, %c0_i32 : i32
    %1 = arith.extui %0 : i1 to i32
    %cst = arith.constant -1.000000e+30 : f32
    %c0_i32_0 = arith.constant 0 : i32
    %2 = arith.cmpi ne, %1, %c0_i32_0 : i32
    scf.if %2 {
      %82 = vector.broadcast %cst : f32 to vector<8x1xf32>
      %c0_45 = arith.constant 0 : index
      %c0_46 = arith.constant 0 : index
      %83 = vector.load %arg14[%c0_45, %c0_46] : memref<8x1xf32, #tpu.memory_space<vmem>>, vector<8x1xf32>
      tpu.vector_store %arg14[%c0_45, %c0_46], %82 {strides = array<i32>} : memref<8x1xf32, #tpu.memory_space<vmem>>, vector<8x1xf32>,
      %cst_47 = arith.constant 0.000000e+00 : f32
      %84 = vector.broadcast %cst_47 : f32 to vector<8x1xf32>
      %c0_48 = arith.constant 0 : index
      %c0_49 = arith.constant 0 : index
      %85 = vector.load %arg15[%c0_48, %c0_49] : memref<8x1xf32, #tpu.memory_space<vmem>>, vector<8x1xf32>
      tpu.vector_store %arg15[%c0_48, %c0_49], %84 {strides = array<i32>} : memref<8x1xf32, #tpu.memory_space<vmem>>, vector<8x1xf32>,
      %cst_50 = arith.constant 0.000000e+00 : f32
      %86 = vector.broadcast %cst_50 : f32 to vector<8x32xf32>
      %c0_51 = arith.constant 0 : index
      %c0_52 = arith.constant 0 : index
      %87 = vector.load %arg16[%c0_51, %c0_52] : memref<8x32xf32, #tpu.memory_space<vmem>>, vector<8x32xf32>
      tpu.vector_store %arg16[%c0_51, %c0_52], %86 {strides = array<i32>} : memref<8x32xf32, #tpu.memory_space<vmem>>, vector<8x32xf32>,
    } else {
    }
    %c0 = arith.constant 0 : index
    %c0_1 = arith.constant 0 : index
    %3 = vector.load %arg1[%c0, %c0_1] : memref<256x64xf32, #tpu.memory_space<vmem>>, vector<256x64xf32>
    %4 = arith.truncf %3 : vector<256x64xf32> to vector<256x64xbf16>
    %c0_2 = arith.constant 0 : index
    %c0_3 = arith.constant 0 : index
    %5 = vector.load %arg3[%c0_2, %c0_3] : memref<64x32xbf16, #tpu.memory_space<vmem>>, vector<64x32xbf16>
    %cst_4 = arith.constant dense<0.000000e+00> : vector<256x32xf32>
    %6 = tpu.matmul %4, %5, %cst_4 {dimension_numbers = #tpu.dot_dimension_numbers<[1], [0], [0], [1], [0, 0, 1, 1], [], []>} : vector<256x64xbf16>, vector<64x32xbf16>, vector<256x32xf32> -> vector<256x32xf32>
    %c0_5 = arith.constant 0 : index
    %c0_6 = arith.constant 0 : index
    %7 = vector.load %arg4[%c0_5, %c0_6] : memref<1x32xf32, #tpu.memory_space<vmem>>, vector<1x32xf32>
    %8 = vector.broadcast %7 : vector<1x32xf32> to vector<256x32xf32>
    %9 = arith.addf %6, %8 : vector<256x32xf32>
    %cst_7 = arith.constant 0.000000e+00 : f32
    %10 = vector.broadcast %cst_7 : f32 to vector<256x32xf32>
    %11 = arith.maximumf %9, %10 : vector<256x32xf32>
    %12 = tpu.iota {dimensions = array<i32: 0>} : vector<256x1xi32>
    %c256_i32 = arith.constant 256 : i32
    %13 = arith.muli %arg0, %c256_i32 : i32
    %14 = vector.broadcast %13 : i32 to vector<256x1xi32>
    %15 = arith.addi %12, %14 : vector<256x1xi32>
    %c384_i32 = arith.constant 384 : i32
    %16 = vector.broadcast %c384_i32 : i32 to vector<256x1xi32>
    %17 = arith.cmpi slt, %15, %16 : vector<256x1xi32>
    %cst_8 = arith.constant 0.000000e+00 : f32
    %18 = vector.shape_cast %17 : vector<256x1xi1> to vector<256x1xi1>
    %19 = vector.broadcast %18 : vector<256x1xi1> to vector<256x32xi1>
    %20 = vector.broadcast %cst_8 : f32 to vector<256x32xf32>
    %21 = arith.select %19, %11, %20 : vector<256x32xi1>, vector<256x32xf32>
    %22 = arith.truncf %21 : vector<256x32xf32> to vector<256x32xbf16>
    %c0_9 = arith.constant 0 : index
    %c0_10 = arith.constant 0 : index
    %23 = vector.load %arg5[%c0_9, %c0_10] : memref<32x32xbf16, #tpu.memory_space<vmem>>, vector<32x32xbf16>
    %cst_11 = arith.constant dense<0.000000e+00> : vector<256x32xf32>
    %24 = tpu.matmul %22, %23, %cst_11 {dimension_numbers = #tpu.dot_dimension_numbers<[1], [0], [0], [1], [0, 0, 1, 1], [], []>} : vector<256x32xbf16>, vector<32x32xbf16>, vector<256x32xf32> -> vector<256x32xf32>
    %c0_12 = arith.constant 0 : index
    %c0_13 = arith.constant 0 : index
    %25 = vector.load %arg6[%c0_12, %c0_13] : memref<1x32xf32, #tpu.memory_space<vmem>>, vector<1x32xf32>
    %26 = vector.broadcast %25 : vector<1x32xf32> to vector<256x32xf32>
    %27 = arith.addf %24, %26 : vector<256x32xf32>
    %c0_14 = arith.constant 0 : index
    %c0_15 = arith.constant 0 : index
    %28 = vector.load %arg7[%c0_14, %c0_15] : memref<32x32xbf16, #tpu.memory_space<vmem>>, vector<32x32xbf16>
    %cst_16 = arith.constant dense<0.000000e+00> : vector<256x32xf32>
    %29 = tpu.matmul %22, %28, %cst_16 {dimension_numbers = #tpu.dot_dimension_numbers<[1], [0], [0], [1], [0, 0, 1, 1], [], []>} : vector<256x32xbf16>, vector<32x32xbf16>, vector<256x32xf32> -> vector<256x32xf32>
    %c0_17 = arith.constant 0 : index
    %c0_18 = arith.constant 0 : index
    %30 = vector.load %arg8[%c0_17, %c0_18] : memref<1x32xf32, #tpu.memory_space<vmem>>, vector<1x32xf32>
    %31 = vector.broadcast %30 : vector<1x32xf32> to vector<256x32xf32>
    %32 = arith.addf %29, %31 : vector<256x32xf32>
    %33 = math.tanh %27 : vector<256x32xf32>
    %34 = arith.negf %32 : vector<256x32xf32>
    %35 = math.exp %34 : vector<256x32xf32>
    %cst_19 = arith.constant 1.000000e+00 : f32
    %36 = vector.broadcast %cst_19 : f32 to vector<256x32xf32>
    %37 = arith.addf %36, %35 : vector<256x32xf32>
    %38 = arith.divf %36, %37 : vector<256x32xf32>
    %39 = arith.mulf %33, %38 : vector<256x32xf32>
    %c0_20 = arith.constant 0 : index
    %c0_21 = arith.constant 0 : index
    %40 = vector.load %arg9[%c0_20, %c0_21] : memref<1x32xbf16, #tpu.memory_space<vmem>>, vector<1x32xbf16>
    %41 = arith.truncf %39 : vector<256x32xf32> to vector<256x32xbf16>
    %cst_22 = arith.constant dense<0.000000e+00> : vector<1x256xf32>
    %42 = tpu.matmul %40, %41, %cst_22 {dimension_numbers = #tpu.dot_dimension_numbers<[1], [1], [0], [0], [0, 0, 1, 0], [], []>} : vector<1x32xbf16>, vector<256x32xbf16>, vector<1x256xf32> -> vector<1x256xf32>
    %c0_23 = arith.constant 0 : index
    %c0_24 = arith.constant 0 : index
    %43 = vector.load %arg10[%c0_23, %c0_24] : memref<1x1xf32, #tpu.memory_space<vmem>>, vector<1x1xf32>
    %44 = vector.broadcast %43 : vector<1x1xf32> to vector<1x256xf32>
    %45 = arith.addf %42, %44 : vector<1x256xf32>
    %46 = tpu.iota {dimensions = array<i32: 0>} : vector<8x256xi32>
    %c0_25 = arith.constant 0 : index
    %c0_26 = arith.constant 0 : index
    %47 = vector.load %arg2[%c0_25, %c0_26] : memref<1x256xi32, #tpu.memory_space<vmem>>, vector<1x256xi32>
    %48 = vector.broadcast %47 : vector<1x256xi32> to vector<8x256xi32>
    %49 = arith.cmpi eq, %48, %46 : vector<8x256xi32>
    %cst_27 = arith.constant -1.000000e+30 : f32
    %50 = vector.shape_cast %45 : vector<1x256xf32> to vector<1x256xf32>
    %51 = vector.broadcast %50 : vector<1x256xf32> to vector<8x256xf32>
    %52 = vector.broadcast %cst_27 : f32 to vector<8x256xf32>
    %53 = arith.select %49, %51, %52 : vector<8x256xi1>, vector<8x256xf32>
    %c0_28 = arith.constant 0 : index
    %c0_29 = arith.constant 0 : index
    %54 = vector.load %arg14[%c0_28, %c0_29] : memref<8x1xf32, #tpu.memory_space<vmem>>, vector<8x1xf32>
    %cst_30 = arith.constant dense<0xFF800000> : vector<8xf32>
    %55 = vector.multi_reduction <maximumf>, %53, %cst_30 [1] : vector<8x256xf32> to vector<8xf32>
    %56 = vector.shape_cast %55 : vector<8xf32> to vector<8x1xf32>
    %57 = arith.maximumf %54, %56 : vector<8x1xf32>
    %58 = arith.subf %54, %57 : vector<8x1xf32>
    %59 = math.exp %58 : vector<8x1xf32>
    %60 = vector.broadcast %57 : vector<8x1xf32> to vector<8x256xf32>
    %61 = arith.subf %53, %60 : vector<8x256xf32>
    %62 = math.exp %61 : vector<8x256xf32>
    %cst_31 = arith.constant 0.000000e+00 : f32
    %63 = vector.broadcast %cst_31 : f32 to vector<8x256xf32>
    %64 = arith.select %49, %62, %63 : vector<8x256xi1>, vector<8x256xf32>
    %c0_32 = arith.constant 0 : index
    %c0_33 = arith.constant 0 : index
    %65 = vector.load %arg15[%c0_32, %c0_33] : memref<8x1xf32, #tpu.memory_space<vmem>>, vector<8x1xf32>
    %66 = arith.mulf %59, %65 : vector<8x1xf32>
    %cst_34 = arith.constant dense<0.000000e+00> : vector<8xf32>
    %67 = vector.multi_reduction <add>, %64, %cst_34 [1] : vector<8x256xf32> to vector<8xf32>
    %68 = vector.shape_cast %67 : vector<8xf32> to vector<8x1xf32>
    %69 = arith.addf %66, %68 : vector<8x1xf32>
    %c0_35 = arith.constant 0 : index
    %c0_36 = arith.constant 0 : index
    %70 = vector.load %arg15[%c0_35, %c0_36] : memref<8x1xf32, #tpu.memory_space<vmem>>, vector<8x1xf32>
    tpu.vector_store %arg15[%c0_35, %c0_36], %69 {strides = array<i32>} : memref<8x1xf32, #tpu.memory_space<vmem>>, vector<8x1xf32>,
    %c0_37 = arith.constant 0 : index
    %c0_38 = arith.constant 0 : index
    %71 = vector.load %arg16[%c0_37, %c0_38] : memref<8x32xf32, #tpu.memory_space<vmem>>, vector<8x32xf32>
    %72 = vector.broadcast %59 : vector<8x1xf32> to vector<8x32xf32>
    %73 = arith.mulf %72, %71 : vector<8x32xf32>
    %74 = arith.truncf %64 : vector<8x256xf32> to vector<8x256xbf16>
    %cst_39 = arith.constant dense<0.000000e+00> : vector<8x32xf32>
    %75 = tpu.matmul %74, %22, %cst_39 {dimension_numbers = #tpu.dot_dimension_numbers<[1], [0], [0], [1], [0, 0, 1, 1], [], []>} : vector<8x256xbf16>, vector<256x32xbf16>, vector<8x32xf32> -> vector<8x32xf32>
    %76 = arith.addf %73, %75 : vector<8x32xf32>
    %c0_40 = arith.constant 0 : index
    %c0_41 = arith.constant 0 : index
    %77 = vector.load %arg16[%c0_40, %c0_41] : memref<8x32xf32, #tpu.memory_space<vmem>>, vector<8x32xf32>
    tpu.vector_store %arg16[%c0_40, %c0_41], %76 {strides = array<i32>} : memref<8x32xf32, #tpu.memory_space<vmem>>, vector<8x32xf32>,
    %c0_42 = arith.constant 0 : index
    %c0_43 = arith.constant 0 : index
    %78 = vector.load %arg14[%c0_42, %c0_43] : memref<8x1xf32, #tpu.memory_space<vmem>>, vector<8x1xf32>
    tpu.vector_store %arg14[%c0_42, %c0_43], %57 {strides = array<i32>} : memref<8x1xf32, #tpu.memory_space<vmem>>, vector<8x1xf32>,
    %c1_i32 = arith.constant 1 : i32
    %79 = arith.cmpi eq, %arg0, %c1_i32 : i32
    %80 = arith.extui %79 : i1 to i32
    %c0_i32_44 = arith.constant 0 : i32
    %81 = arith.cmpi ne, %80, %c0_i32_44 : i32
    scf.if %81 {
      %c0_45 = arith.constant 0 : index
      %c0_46 = arith.constant 0 : index
      %82 = vector.load %arg15[%c0_45, %c0_46] : memref<8x1xf32, #tpu.memory_space<vmem>>, vector<8x1xf32>
      %cst_47 = arith.constant 1.000000e-30 : f32
      %83 = vector.broadcast %cst_47 : f32 to vector<8x1xf32>
      %84 = arith.maximumf %82, %83 : vector<8x1xf32>
      %cst_48 = arith.constant 1.000000e+00 : f32
      %85 = vector.broadcast %cst_48 : f32 to vector<8x1xf32>
      %86 = arith.divf %85, %84 : vector<8x1xf32>
      %cst_49 = arith.constant 0.000000e+00 : f32
      %87 = vector.broadcast %cst_49 : f32 to vector<8x1xf32>
      %88 = arith.cmpf ogt, %82, %87 : vector<8x1xf32>
      %cst_50 = arith.constant 0.000000e+00 : f32
      %89 = vector.broadcast %cst_50 : f32 to vector<8x1xf32>
      %90 = arith.select %88, %86, %89 : vector<8x1xi1>, vector<8x1xf32>
      %c0_51 = arith.constant 0 : index
      %c0_52 = arith.constant 0 : index
      %91 = vector.load %arg16[%c0_51, %c0_52] : memref<8x32xf32, #tpu.memory_space<vmem>>, vector<8x32xf32>
      %92 = vector.broadcast %90 : vector<8x1xf32> to vector<8x32xf32>
      %93 = arith.mulf %91, %92 : vector<8x32xf32>
      %94 = arith.truncf %93 : vector<8x32xf32> to vector<8x32xbf16>
      %c0_53 = arith.constant 0 : index
      %c0_54 = arith.constant 0 : index
      %95 = vector.load %arg11[%c0_53, %c0_54] : memref<32x4xbf16, #tpu.memory_space<vmem>>, vector<32x4xbf16>
      %cst_55 = arith.constant dense<0.000000e+00> : vector<8x4xf32>
      %96 = tpu.matmul %94, %95, %cst_55 {dimension_numbers = #tpu.dot_dimension_numbers<[1], [0], [0], [1], [0, 0, 1, 1], [], []>} : vector<8x32xbf16>, vector<32x4xbf16>, vector<8x4xf32> -> vector<8x4xf32>
      %c0_56 = arith.constant 0 : index
      %c0_57 = arith.constant 0 : index
      %97 = vector.load %arg12[%c0_56, %c0_57] : memref<1x4xf32, #tpu.memory_space<vmem>>, vector<1x4xf32>
      %98 = vector.broadcast %97 : vector<1x4xf32> to vector<8x4xf32>
      %99 = arith.addf %96, %98 : vector<8x4xf32>
      %c0_58 = arith.constant 0 : index
      %c0_59 = arith.constant 0 : index
      %100 = vector.load %arg13[%c0_58, %c0_59] : memref<8x4xf32, #tpu.memory_space<vmem>>, vector<8x4xf32>
      tpu.vector_store %arg13[%c0_58, %c0_59], %99 {strides = array<i32>} : memref<8x4xf32, #tpu.memory_space<vmem>>, vector<8x4xf32>,
    } else {
    }
    return
  }
  func.func @transform_0(%arg0: i32) -> (i32, i32) {
    %c0_i32 = arith.constant 0 : i32
    %c0_i32_0 = arith.constant 0 : i32
    return %arg0, %c0_i32 : i32, i32
  }
  func.func @transform_1(%arg0: i32) -> (i32, i32) {
    %c0_i32 = arith.constant 0 : i32
    %c0_i32_0 = arith.constant 0 : i32
    return %c0_i32, %arg0 : i32, i32
  }
  func.func @transform_2(%arg0: i32) -> (i32, i32) {
    %c0_i32 = arith.constant 0 : i32
    %c0_i32_0 = arith.constant 0 : i32
    %c0_i32_1 = arith.constant 0 : i32
    return %c0_i32, %c0_i32_0 : i32, i32
  }
  func.func @transform_3(%arg0: i32) -> (i32, i32) {
    %c0_i32 = arith.constant 0 : i32
    %c0_i32_0 = arith.constant 0 : i32
    %c0_i32_1 = arith.constant 0 : i32
    return %c0_i32, %c0_i32_0 : i32, i32
  }
  func.func @transform_4(%arg0: i32) -> (i32, i32) {
    %c0_i32 = arith.constant 0 : i32
    %c0_i32_0 = arith.constant 0 : i32
    %c0_i32_1 = arith.constant 0 : i32
    return %c0_i32, %c0_i32_0 : i32, i32
  }
  func.func @transform_5(%arg0: i32) -> (i32, i32) {
    %c0_i32 = arith.constant 0 : i32
    %c0_i32_0 = arith.constant 0 : i32
    %c0_i32_1 = arith.constant 0 : i32
    return %c0_i32, %c0_i32_0 : i32, i32
  }
  func.func @transform_6(%arg0: i32) -> (i32, i32) {
    %c0_i32 = arith.constant 0 : i32
    %c0_i32_0 = arith.constant 0 : i32
    %c0_i32_1 = arith.constant 0 : i32
    return %c0_i32, %c0_i32_0 : i32, i32
  }
  func.func @transform_7(%arg0: i32) -> (i32, i32) {
    %c0_i32 = arith.constant 0 : i32
    %c0_i32_0 = arith.constant 0 : i32
    %c0_i32_1 = arith.constant 0 : i32
    return %c0_i32, %c0_i32_0 : i32, i32
  }
  func.func @transform_8(%arg0: i32) -> (i32, i32) {
    %c0_i32 = arith.constant 0 : i32
    %c0_i32_0 = arith.constant 0 : i32
    %c0_i32_1 = arith.constant 0 : i32
    return %c0_i32, %c0_i32_0 : i32, i32
  }
  func.func @transform_9(%arg0: i32) -> (i32, i32) {
    %c0_i32 = arith.constant 0 : i32
    %c0_i32_0 = arith.constant 0 : i32
    %c0_i32_1 = arith.constant 0 : i32
    return %c0_i32, %c0_i32_0 : i32, i32
  }
  func.func @transform_10(%arg0: i32) -> (i32, i32) {
    %c0_i32 = arith.constant 0 : i32
    %c0_i32_0 = arith.constant 0 : i32
    %c0_i32_1 = arith.constant 0 : i32
    return %c0_i32, %c0_i32_0 : i32, i32
  }
  func.func @transform_11(%arg0: i32) -> (i32, i32) {
    %c0_i32 = arith.constant 0 : i32
    %c0_i32_0 = arith.constant 0 : i32
    %c0_i32_1 = arith.constant 0 : i32
    return %c0_i32, %c0_i32_0 : i32, i32
  }
  func.func @transform_12(%arg0: i32) -> (i32, i32) {
    %c0_i32 = arith.constant 0 : i32
    %c0_i32_0 = arith.constant 0 : i32
    %c0_i32_1 = arith.constant 0 : i32
    return %c0_i32, %c0_i32_0 : i32, i32
  }
}

</mosaic_0001>

<llo_original>
// kernel: tpu_custom_call.1
$region0: #{tpu_custom_call.1}
  #allocation0 [shape = 'u32[]', space=smem, size = 0x4, offset = 0x4, fixed_abs, tag = 'smem constant byte address 0x4 - core index']
  #allocation1 [shape = 'u32[72,128]{1,0:T(1,128)}', space=vmem, size = 0x9000, scoped, tag = 'internal scratch']
  #allocation2 [shape = 'f32[8,1]{1,0:T(8,128)}', space=vmem, size = 0x1000, scoped, tag = 'scratch operand']
  #allocation3 [shape = 'f32[8,1]{1,0:T(8,128)}', space=vmem, size = 0x1000, scoped, tag = 'scratch operand']
  #allocation4 [shape = 'f32[8,32]{1,0:T(8,128)}', space=vmem, size = 0x1000, scoped, tag = 'scratch operand']
  #allocation5 [shape = 'f32[1,1]{1,0:T(1,128)S(1)}', space=vmem, size = 0x200, scoped, tag = 'scoped memory for tpu_custom_call.1']
  %s0 = inlined_call_operand.vmem [shape: f32[384,64], index: 0, kind: input, shape index: {}]
  %s1 = inlined_call_operand.vmem [shape: s32[1,512], index: 1, kind: input, shape index: {}]
  %s2 = inlined_call_operand.vmem [shape: bf16[64,32], index: 2, kind: input, shape index: {}]
  %s3 = inlined_call_operand.vmem [shape: f32[1,32], index: 3, kind: input, shape index: {}]
  %s4 = inlined_call_operand.vmem [shape: bf16[32,32], index: 4, kind: input, shape index: {}]
  %s5 = inlined_call_operand.vmem [shape: f32[1,32], index: 5, kind: input, shape index: {}]
  %s6 = inlined_call_operand.vmem [shape: bf16[32,32], index: 6, kind: input, shape index: {}]
  %s7 = inlined_call_operand.vmem [shape: f32[1,32], index: 7, kind: input, shape index: {}]
  %s8 = inlined_call_operand.vmem [shape: bf16[1,32], index: 8, kind: input, shape index: {}]
  %s9 = inlined_call_operand.<no memory space> [shape: f32[1,1], index: 9, kind: input, shape index: {}]
  %s10 = inlined_call_operand.vmem [shape: bf16[32,4], index: 10, kind: input, shape index: {}]
  %s11 = inlined_call_operand.vmem [shape: f32[1,4], index: 11, kind: input, shape index: {}]
  %s12 = inlined_call_operand.vmem [shape: f32[8,4], index: 12, kind: output, shape index: {}]
  %s13 = sld [smem:[#allocation0]]
  $region89: #{tpu_custom_call.1} parent=0
    _
  %s15 = ssub.s32 1, %s13
  %s16 = scalar_select 0, %s15, %s13
  %v17 = vstv %s9
  %18 = vst [vmem:[#allocation5] sm:$0x1] %v17
  loop: start=0, step=1, limit=4
  $region2: #{tpu_custom_call.1} parent=0 // loop_pre_header
    _
  $region3: #{tpu_custom_call.1} parent=0 // loop_header
    %s20 = sphi 0, %s24
    %p21 = scmp.ge.s32.totalorder %s20, 4
    %s30 = sphi 0, %s32
    %s33 = sphi 0, %s30
    %s34 = sphi 0, %s33
    %s50 = sphi 0, %s34
    %s56 = sphi 0, %s58
    %s59 = sphi 0, %s56
    %s60 = sphi 0, %s59
    %s76 = sphi 0, %s60
    %s80 = sphi 0, %s80
    %s82 = sphi 0, %s80
    %s83 = sphi 0, %s82
    %s97 = sphi 0, %s83
    %s101 = sphi 0, %s101
    %s103 = sphi 0, %s101
    %s104 = sphi 0, %s103
    %s118 = sphi 0, %s104
    %s122 = sphi 0, %s122
    %s124 = sphi 0, %s122
    %s125 = sphi 0, %s124
    %s139 = sphi 0, %s125
    %s143 = sphi 0, %s143
    %s145 = sphi 0, %s143
    %s146 = sphi 0, %s145
    %s160 = sphi 0, %s146
    %s164 = sphi 0, %s164
    %s166 = sphi 0, %s164
    %s167 = sphi 0, %s166
    %s181 = sphi 0, %s167
    %s185 = sphi 0, %s185
    %s187 = sphi 0, %s185
    %s188 = sphi 0, %s187
    %s202 = sphi 0, %s188
    %s206 = sphi 0, %s206
    %s208 = sphi 0, %s206
    %s209 = sphi 0, %s208
    %s223 = sphi 0, %s209
    %s227 = sphi 0, %s227
    %s229 = sphi 0, %s227
    %s230 = sphi 0, %s229
    %s244 = sphi 0, %s230
    %s248 = sphi 0, %s248
    %s250 = sphi 0, %s248
    %s251 = sphi 0, %s250
    %s265 = sphi 0, %s251
    %s269 = sphi 0, %s269
    %s271 = sphi 0, %s269
    %s272 = sphi 0, %s271
    %s286 = sphi 0, %s272
    %s290 = sphi 0, %s290
    %s292 = sphi 0, %s290
    %s293 = sphi 0, %s292
    %s307 = sphi 0, %s293
  $region4: #{tpu_custom_call.1} parent=0 // loop_header_branch
    %23 = sbr.rel (%p21) target = $region8
  $region5: #{tpu_custom_call.1} parent=0 // loop_body
    %s25 = ssub.s32 %s20, 1
    %s26 = ssub.s32 %s20, 2
    %s27 = sadd.s32 %s20, 1
    %s28 = ssub.s32 %s20, %s27
    %p29 = scmp.eq.s32.totalorder %s28, 0
    %s31 = sadd.s32 %s30, 1
    %s32 = scalar_select %p29, %s30, %s31
    %p35 = pneg %p29
    %p36 = scmp.eq.s32.totalorder %s20, 1
    %p37 = por %p35, %p36
    %p38 = scmp.ne.s32.totalorder %s30, %s33
    %p39 = scmp.eq.s32.totalorder %s20, 0
    %p40 = por %p38, %p39
    %p41 = scmp.ne.s32.totalorder %s30, %s33
    %p42 = scmp.eq.s32.totalorder %s25, 1
    %p43 = por %p41, %p42
    %p44 = scmp.ne.s32.totalorder %s33, %s34
    %p45 = scmp.eq.s32.totalorder %s25, 0
    %p46 = por %p44, %p45
    %p47 = scmp.ne.s32.totalorder %s33, %s34
    %p48 = scmp.eq.s32.totalorder %s26, 1
    %p49 = por %p47, %p48
    %p51 = scmp.ne.s32.totalorder %s34, %s50
    %p52 = scmp.eq.s32.totalorder %s26, 0
    %p53 = por %p51, %p52
    %s54 = ssub.s32 %s20, %s27
    %p55 = scmp.eq.s32.totalorder %s54, 0
    %s57 = sadd.s32 %s56, 1
    %s58 = scalar_select %p55, %s56, %s57
    %p61 = pneg %p55
    %p62 = scmp.eq.s32.totalorder %s20, 1
    %p63 = por %p61, %p62
    %p64 = scmp.ne.s32.totalorder %s56, %s59
    %p65 = scmp.eq.s32.totalorder %s20, 0
    %p66 = por %p64, %p65
    %p67 = scmp.ne.s32.totalorder %s56, %s59
    %p68 = scmp.eq.s32.totalorder %s25, 1
    %p69 = por %p67, %p68
    %p70 = scmp.ne.s32.totalorder %s59, %s60
    %p71 = scmp.eq.s32.totalorder %s25, 0
    %p72 = por %p70, %p71
    %p73 = scmp.ne.s32.totalorder %s59, %s60
    %p74 = scmp.eq.s32.totalorder %s26, 1
    %p75 = por %p73, %p74
    %p77 = scmp.ne.s32.totalorder %s60, %s76
    %p78 = scmp.eq.s32.totalorder %s26, 0
    %p79 = por %p77, %p78
    %s81 = sadd.s32 %s80, 1
    %p84 = scmp.eq.s32.totalorder %s20, 1
    %p85 = scmp.ne.s32.totalorder %s80, %s82
    %p86 = scmp.eq.s32.totalorder %s20, 0
    %p87 = por %p85, %p86
    %p88 = scmp.ne.s32.totalorder %s80, %s82
    %p89 = scmp.eq.s32.totalorder %s25, 1
    %p90 = por %p88, %p89
    %p91 = scmp.ne.s32.totalorder %s82, %s83
    %p92 = scmp.eq.s32.totalorder %s25, 0
    %p93 = por %p91, %p92
    %p94 = scmp.ne.s32.totalorder %s82, %s83
    %p95 = scmp.eq.s32.totalorder %s26, 1
    %p96 = por %p94, %p95
    %p98 = scmp.ne.s32.totalorder %s83, %s97
    %p99 = scmp.eq.s32.totalorder %s26, 0
    %p100 = por %p98, %p99
    %s102 = sadd.s32 %s101, 1
    %p105 = scmp.eq.s32.totalorder %s20, 1
    %p106 = scmp.ne.s32.totalorder %s101, %s103
    %p107 = scmp.eq.s32.totalorder %s20, 0
    %p108 = por %p106, %p107
    %p109 = scmp.ne.s32.totalorder %s101, %s103
    %p110 = scmp.eq.s32.totalorder %s25, 1
    %p111 = por %p109, %p110
    %p112 = scmp.ne.s32.totalorder %s103, %s104
    %p113 = scmp.eq.s32.totalorder %s25, 0
    %p114 = por %p112, %p113
    %p115 = scmp.ne.s32.totalorder %s103, %s104
    %p116 = scmp.eq.s32.totalorder %s26, 1
    %p117 = por %p115, %p116
    %p119 = scmp.ne.s32.totalorder %s104, %s118
    %p120 = scmp.eq.s32.totalorder %s26, 0
    %p121 = por %p119, %p120
    %s123 = sadd.s32 %s122, 1
    %p126 = scmp.eq.s32.totalorder %s20, 1
    %p127 = scmp.ne.s32.totalorder %s122, %s124
    %p128 = scmp.eq.s32.totalorder %s20, 0
    %p129 = por %p127, %p128
    %p130 = scmp.ne.s32.totalorder %s122, %s124
    %p131 = scmp.eq.s32.totalorder %s25, 1
    %p132 = por %p130, %p131
    %p133 = scmp.ne.s32.totalorder %s124, %s125
    %p134 = scmp.eq.s32.totalorder %s25, 0
    %p135 = por %p133, %p134
    %p136 = scmp.ne.s32.totalorder %s124, %s125
    %p137 = scmp.eq.s32.totalorder %s26, 1
    %p138 = por %p136, %p137
    %p140 = scmp.ne.s32.totalorder %s125, %s139
    %p141 = scmp.eq.s32.totalorder %s26, 0
    %p142 = por %p140, %p141
    %s144 = sadd.s32 %s143, 1
    %p147 = scmp.eq.s32.totalorder %s20, 1
    %p148 = scmp.ne.s32.totalorder %s143, %s145
    %p149 = scmp.eq.s32.totalorder %s20, 0
    %p150 = por %p148, %p149
    %p151 = scmp.ne.s32.totalorder %s143, %s145
    %p152 = scmp.eq.s32.totalorder %s25, 1
    %p153 = por %p151, %p152
    %p154 = scmp.ne.s32.totalorder %s145, %s146
    %p155 = scmp.eq.s32.totalorder %s25, 0
    %p156 = por %p154, %p155
    %p157 = scmp.ne.s32.totalorder %s145, %s146
    %p158 = scmp.eq.s32.totalorder %s26, 1
    %p159 = por %p157, %p158
    %p161 = scmp.ne.s32.totalorder %s146, %s160
    %p162 = scmp.eq.s32.totalorder %s26, 0
    %p163 = por %p161, %p162
    %s165 = sadd.s32 %s164, 1
    %p168 = scmp.eq.s32.totalorder %s20, 1
    %p169 = scmp.ne.s32.totalorder %s164, %s166
    %p170 = scmp.eq.s32.totalorder %s20, 0
    %p171 = por %p169, %p170
    %p172 = scmp.ne.s32.totalorder %s164, %s166
    %p173 = scmp.eq.s32.totalorder %s25, 1
    %p174 = por %p172, %p173
    %p175 = scmp.ne.s32.totalorder %s166, %s167
    %p176 = scmp.eq.s32.totalorder %s25, 0
    %p177 = por %p175, %p176
    %p178 = scmp.ne.s32.totalorder %s166, %s167
    %p179 = scmp.eq.s32.totalorder %s26, 1
    %p180 = por %p178, %p179
    %p182 = scmp.ne.s32.totalorder %s167, %s181
    %p183 = scmp.eq.s32.totalorder %s26, 0
    %p184 = por %p182, %p183
    %s186 = sadd.s32 %s185, 1
    %p189 = scmp.eq.s32.totalorder %s20, 1
    %p190 = scmp.ne.s32.totalorder %s185, %s187
    %p191 = scmp.eq.s32.totalorder %s20, 0
    %p192 = por %p190, %p191
    %p193 = scmp.ne.s32.totalorder %s185, %s187
    %p194 = scmp.eq.s32.totalorder %s25, 1
    %p195 = por %p193, %p194
    %p196 = scmp.ne.s32.totalorder %s187, %s188
    %p197 = scmp.eq.s32.totalorder %s25, 0
    %p198 = por %p196, %p197
    %p199 = scmp.ne.s32.totalorder %s187, %s188
    %p200 = scmp.eq.s32.totalorder %s26, 1
    %p201 = por %p199, %p200
    %p203 = scmp.ne.s32.totalorder %s188, %s202
    %p204 = scmp.eq.s32.totalorder %s26, 0
    %p205 = por %p203, %p204
    %s207 = sadd.s32 %s206, 1
    %p210 = scmp.eq.s32.totalorder %s20, 1
    %p211 = scmp.ne.s32.totalorder %s206, %s208
    %p212 = scmp.eq.s32.totalorder %s20, 0
    %p213 = por %p211, %p212
    %p214 = scmp.ne.s32.totalorder %s206, %s208
    %p215 = scmp.eq.s32.totalorder %s25, 1
    %p216 = por %p214, %p215
    %p217 = scmp.ne.s32.totalorder %s208, %s209
    %p218 = scmp.eq.s32.totalorder %s25, 0
    %p219 = por %p217, %p218
    %p220 = scmp.ne.s32.totalorder %s208, %s209
    %p221 = scmp.eq.s32.totalorder %s26, 1
    %p222 = por %p220, %p221
    %p224 = scmp.ne.s32.totalorder %s209, %s223
    %p225 = scmp.eq.s32.totalorder %s26, 0
    %p226 = por %p224, %p225
    %s228 = sadd.s32 %s227, 1
    %p231 = scmp.eq.s32.totalorder %s20, 1
    %p232 = scmp.ne.s32.totalorder %s227, %s229
    %p233 = scmp.eq.s32.totalorder %s20, 0
    %p234 = por %p232, %p233
    %p235 = scmp.ne.s32.totalorder %s227, %s229
    %p236 = scmp.eq.s32.totalorder %s25, 1
    %p237 = por %p235, %p236
    %p238 = scmp.ne.s32.totalorder %s229, %s230
    %p239 = scmp.eq.s32.totalorder %s25, 0
    %p240 = por %p238, %p239
    %p241 = scmp.ne.s32.totalorder %s229, %s230
    %p242 = scmp.eq.s32.totalorder %s26, 1
    %p243 = por %p241, %p242
    %p245 = scmp.ne.s32.totalorder %s230, %s244
    %p246 = scmp.eq.s32.totalorder %s26, 0
    %p247 = por %p245, %p246
    %s249 = sadd.s32 %s248, 1
    %p252 = scmp.eq.s32.totalorder %s20, 1
    %p253 = scmp.ne.s32.totalorder %s248, %s250
    %p254 = scmp.eq.s32.totalorder %s20, 0
    %p255 = por %p253, %p254
    %p256 = scmp.ne.s32.totalorder %s248, %s250
    %p257 = scmp.eq.s32.totalorder %s25, 1
    %p258 = por %p256, %p257
    %p259 = scmp.ne.s32.totalorder %s250, %s251
    %p260 = scmp.eq.s32.totalorder %s25, 0
    %p261 = por %p259, %p260
    %p262 = scmp.ne.s32.totalorder %s250, %s251
    %p263 = scmp.eq.s32.totalorder %s26, 1
    %p264 = por %p262, %p263
    %p266 = scmp.ne.s32.totalorder %s251, %s265
    %p267 = scmp.eq.s32.totalorder %s26, 0
    %p268 = por %p266, %p267
    %s270 = sadd.s32 %s269, 1
    %p273 = scmp.eq.s32.totalorder %s20, 1
    %p274 = scmp.ne.s32.totalorder %s269, %s271
    %p275 = scmp.eq.s32.totalorder %s20, 0
    %p276 = por %p274, %p275
    %p277 = scmp.ne.s32.totalorder %s269, %s271
    %p278 = scmp.eq.s32.totalorder %s25, 1
    %p279 = por %p277, %p278
    %p280 = scmp.ne.s32.totalorder %s271, %s272
    %p281 = scmp.eq.s32.totalorder %s25, 0
    %p282 = por %p280, %p281
    %p283 = scmp.ne.s32.totalorder %s271, %s272
    %p284 = scmp.eq.s32.totalorder %s26, 1
    %p285 = por %p283, %p284
    %p287 = scmp.ne.s32.totalorder %s272, %s286
    %p288 = scmp.eq.s32.totalorder %s26, 0
    %p289 = por %p287, %p288
    %s291 = sadd.s32 %s290, 1
    %p294 = scmp.eq.s32.totalorder %s20, 1
    %p295 = scmp.ne.s32.totalorder %s290, %s292
    %p296 = scmp.eq.s32.totalorder %s20, 0
    %p297 = por %p295, %p296
    %p298 = scmp.ne.s32.totalorder %s290, %s292
    %p299 = scmp.eq.s32.totalorder %s25, 1
    %p300 = por %p298, %p299
    %p301 = scmp.ne.s32.totalorder %s292, %s293
    %p302 = scmp.eq.s32.totalorder %s25, 0
    %p303 = por %p301, %p302
    %p304 = scmp.ne.s32.totalorder %s292, %s293
    %p305 = scmp.eq.s32.totalorder %s26, 1
    %p306 = por %p304, %p305
    %p308 = scmp.ne.s32.totalorder %s293, %s307
    %p309 = scmp.eq.s32.totalorder %s26, 0
    %p310 = por %p308, %p309
    %p311 = scmp.le.s32.totalorder 1, %s20
    %p312 = scmp.lt.s32.totalorder %s20, 3
    %p313 = pnand %p311, %p312
    %p314 = pneg %p313
    // Predicated region
    $region9: #{tpu_custom_call.1} parent=5 // pred_check
      _
    $region10: #{tpu_custom_call.1} parent=5 // pred_check_branch
      %316 = sbr.rel (%p313) target = $region12
    $region11: #{tpu_custom_call.1} parent=5 // pred_region
      %s317 = ssub.s32 %s20, 1
      // Predicated region
      $region13: #{tpu_custom_call.1} parent=11 // pred_check
        %p318 = pneg %p93
      $region14: #{tpu_custom_call.1} parent=11 // pred_check_branch
        %320 = sbr.rel (%p318) target = $region16
      $region15: #{tpu_custom_call.1} parent=11 // pred_region
        _
      $region16: #{tpu_custom_call.1} parent=11 // pred_fallthru
        _
      // Predicated region
      $region17: #{tpu_custom_call.1} parent=11 // pred_check
        %p321 = pneg %p114
      $region18: #{tpu_custom_call.1} parent=11 // pred_check_branch
        %323 = sbr.rel (%p321) target = $region20
      $region19: #{tpu_custom_call.1} parent=11 // pred_region
        _
      $region20: #{tpu_custom_call.1} parent=11 // pred_fallthru
        _
      // Predicated region
      $region21: #{tpu_custom_call.1} parent=11 // pred_check
        %p324 = pneg %p135
      $region22: #{tpu_custom_call.1} parent=11 // pred_check_branch
        %326 = sbr.rel (%p324) target = $region24
      $region23: #{tpu_custom_call.1} parent=11 // pred_region
        _
      $region24: #{tpu_custom_call.1} parent=11 // pred_fallthru
        _
      // Predicated region
      $region25: #{tpu_custom_call.1} parent=11 // pred_check
        %p327 = pneg %p156
      $region26: #{tpu_custom_call.1} parent=11 // pred_check_branch
        %329 = sbr.rel (%p327) target = $region28
      $region27: #{tpu_custom_call.1} parent=11 // pred_region
        _
      $region28: #{tpu_custom_call.1} parent=11 // pred_fallthru
        _
      // Predicated region
      $region29: #{tpu_custom_call.1} parent=11 // pred_check
        %p330 = pneg %p177
      $region30: #{tpu_custom_call.1} parent=11 // pred_check_branch
        %332 = sbr.rel (%p330) target = $region32
      $region31: #{tpu_custom_call.1} parent=11 // pred_region
        _
      $region32: #{tpu_custom_call.1} parent=11 // pred_fallthru
        _
      // Predicated region
      $region33: #{tpu_custom_call.1} parent=11 // pred_check
        %p333 = pneg %p198
      $region34: #{tpu_custom_call.1} parent=11 // pred_check_branch
        %335 = sbr.rel (%p333) target = $region36
      $region35: #{tpu_custom_call.1} parent=11 // pred_region
        _
      $region36: #{tpu_custom_call.1} parent=11 // pred_fallthru
        _
      // Predicated region
      $region37: #{tpu_custom_call.1} parent=11 // pred_check
        %p336 = pneg %p219
      $region38: #{tpu_custom_call.1} parent=11 // pred_check_branch
        %338 = sbr.rel (%p336) target = $region40
      $region39: #{tpu_custom_call.1} parent=11 // pred_region
        _
      $region40: #{tpu_custom_call.1} parent=11 // pred_fallthru
        _
      // Predicated region
      $region41: #{tpu_custom_call.1} parent=11 // pred_check
        %p339 = pneg %p240
      $region42: #{tpu_custom_call.1} parent=11 // pred_check_branch
        %341 = sbr.rel (%p339) target = $region44
      $region43: #{tpu_custom_call.1} parent=11 // pred_region
        _
      $region44: #{tpu_custom_call.1} parent=11 // pred_fallthru
        _
      // Predicated region
      $region45: #{tpu_custom_call.1} parent=11 // pred_check
        %p342 = pneg %p261
      $region46: #{tpu_custom_call.1} parent=11 // pred_check_branch
        %344 = sbr.rel (%p342) target = $region48
      $region47: #{tpu_custom_call.1} parent=11 // pred_region
        _
      $region48: #{tpu_custom_call.1} parent=11 // pred_fallthru
        _
      // Predicated region
      $region49: #{tpu_custom_call.1} parent=11 // pred_check
        %p345 = pneg %p282
      $region50: #{tpu_custom_call.1} parent=11 // pred_check_branch
        %347 = sbr.rel (%p345) target = $region52
      $region51: #{tpu_custom_call.1} parent=11 // pred_region
        _
      $region52: #{tpu_custom_call.1} parent=11 // pred_fallthru
        _
    $region12: #{tpu_custom_call.1} parent=5 // pred_fallthru
      _
    %p348 = scmp.lt.s32.totalorder %s20, 2
    // Predicated region
    $region53: #{tpu_custom_call.1} parent=5 // pred_check
      %p349 = pneg %p348
    $region54: #{tpu_custom_call.1} parent=5 // pred_check_branch
      %351 = sbr.rel (%p349) target = $region56
    $region55: #{tpu_custom_call.1} parent=5 // pred_region
      // Predicated region
      $region57: #{tpu_custom_call.1} parent=55 // pred_check
        %p352 = pneg %p40
      $region58: #{tpu_custom_call.1} parent=55 // pred_check_branch
        %354 = sbr.rel (%p352) target = $region60
      $region59: #{tpu_custom_call.1} parent=55 // pred_region
        %s355 = smul.u32 32, %s20
        %s356 = ssub.s32 48, %s355
        %p357 = scmp.lt.s32.totalorder %s356, 32
        %s358 = scalar_select %p357, %s356, 32
        %s359 = smul.u32 8, %s358
        %p360 = scmp.lt.s32.totalorder %s355, 47
        %s361 = scalar_select %p360, %s355, 47
        %s362 = smul.addr %s361, 8
        %s363 = scalar_lea.vmem %s0, %s362
        %s364 = smul.u32 32, %s20
        %s365 = ssub.s32 48, %s364
        %p366 = scmp.lt.s32.totalorder %s365, 32
        %s367 = scalar_select %p366, %s365, 32
        %s368 = smul.u32 8, %s367
      $region60: #{tpu_custom_call.1} parent=55 // pred_fallthru
        _
      // Predicated region
      $region61: #{tpu_custom_call.1} parent=55 // pred_check
        %p369 = pneg %p66
      $region62: #{tpu_custom_call.1} parent=55 // pred_check_branch
        %371 = sbr.rel (%p369) target = $region64
      $region63: #{tpu_custom_call.1} parent=55 // pred_region
        %s372 = smul.u32 2, %s20
        %p373 = scmp.lt.s32.totalorder %s372, 3
        %s374 = scalar_select %p373, %s372, 3
        %s375 = scalar_lea.vmem %s1, %s374
        %s376 = smul.u32 2, %s20
      $region64: #{tpu_custom_call.1} parent=55 // pred_fallthru
        _
    $region56: #{tpu_custom_call.1} parent=5 // pred_fallthru
      _
    %p377 = scmp.le.s32.totalorder 1, %s20
    %p378 = scmp.lt.s32.totalorder %s20, 3
    %p379 = pnand %p377, %p378
    %p380 = pneg %p379
    // Predicated region
    $region65: #{tpu_custom_call.1} parent=5 // pred_check
      _
    $region66: #{tpu_custom_call.1} parent=5 // pred_check_branch
      %382 = sbr.rel (%p379) target = $region68
    $region67: #{tpu_custom_call.1} parent=5 // pred_region
      %s383 = ssub.s32 %s20, 1
      %s384 = smul.u32 32, %s25
      %s385 = ssub.s32 48, %s384
      %p386 = scmp.lt.s32.totalorder %s385, 32
      %s387 = scalar_select %p386, %s385, 32
      %s388 = smul.u32 8, %s387
      %p389 = scmp.lt.s32.totalorder %s384, 47
      %s390 = scalar_select %p389, %s384, 47
      %s391 = smul.addr %s390, 8
      %s392 = scalar_lea.vmem %s0, %s391
      %p393 = pneg %p46
      %p394 = pneg %p43
      %s395 = smul.u32 2, %s25
      %p396 = scmp.lt.s32.totalorder %s395, 3
      %s397 = scalar_select %p396, %s395, 3
      %s398 = scalar_lea.vmem %s1, %s397
      %p399 = pneg %p72
      %p400 = pneg %p69
      %p401 = pneg %p93
      %p402 = pneg %p90
      %p403 = pneg %p114
      %p404 = pneg %p111
      %p405 = pneg %p135
      %p406 = pneg %p132
      %p407 = pneg %p156
      %p408 = pneg %p153
      %p409 = pneg %p177
      %p410 = pneg %p174
      %p411 = pneg %p198
      %p412 = pneg %p195
      %p413 = pneg %p219
      %p414 = pneg %p216
      %p415 = pneg %p240
      %p416 = pneg %p237
      %p417 = pneg %p261
      %p418 = pneg %p258
      %p419 = pneg %p282
      %p420 = pneg %p279
      %p421 = pneg %p303
      %p422 = pneg %p300
      %s423 = smul.u32 32, %s25
      %s424 = ssub.s32 48, %s423
      %p425 = scmp.lt.s32.totalorder %s424, 32
      %s426 = scalar_select %p425, %s424, 32
      %s427 = smul.u32 8, %s426
      %p428 = scmp.lt.s32.totalorder %s423, 47
      %s429 = scalar_select %p428, %s423, 47
      %s430 = smul.addr %s429, 8
      %s431 = scalar_lea.vmem %s0, %s430
      %s432 = smul.u32 32, %s25
      %s433 = ssub.s32 48, %s432
      %p434 = scmp.lt.s32.totalorder %s433, 32
      %s435 = scalar_select %p434, %s433, 32
      %s436 = smul.u32 8, %s435
      %s437 = smul.u32 2, %s25
      %p438 = scmp.lt.s32.totalorder %s437, 3
      %s439 = scalar_select %p438, %s437, 3
      %s440 = scalar_lea.vmem %s1, %s439
      %s441 = smul.u32 2, %s25
      %p443 = scmp.eq.s32.totalorder %s25, 0
      // Predicated region
      $region69: #{tpu_custom_call.1} parent=67 // pred_check
        %p444 = pneg %p443
      $region70: #{tpu_custom_call.1} parent=67 // pred_check_branch
        %446 = sbr.rel (%p444) target = $region72
      $region71: #{tpu_custom_call.1} parent=67 // pred_region
        %vm447 = vcmask 7168
        %448 = vst.msk [vmem:[#allocation2] sm:$0xff] %vm447, -1e+30
        %449 = vst.msk [vmem:[#allocation3] sm:$0xff] %vm447, 0.0
        %vm450 = vcmask 261120
        %451 = vst.msk [vmem:[#allocation4] sm:$0xff] %vm450, 0.0
      $region72: #{tpu_custom_call.1} parent=67 // pred_fallthru
        _
      %v452 = vld [vmem:[%s431] sm:$0xff]
      %v453 = vld [vmem:[%s431 + $0x8] sm:$0xff]
      %v454 = vld [vmem:[%s431 + $0x10] sm:$0xff]
      %v455 = vld [vmem:[%s431 + $0x18] sm:$0xff]
      %v456 = vld [vmem:[%s431 + $0x20] sm:$0xff]
      %v457 = vld [vmem:[%s431 + $0x28] sm:$0xff]
      %v458 = vld [vmem:[%s431 + $0x30] sm:$0xff]
      %v459 = vld [vmem:[%s431 + $0x38] sm:$0xff]
      %v460 = vld [vmem:[%s431 + $0x40] sm:$0xff]
      %v461 = vld [vmem:[%s431 + $0x48] sm:$0xff]
      %v462 = vld [vmem:[%s431 + $0x50] sm:$0xff]
      %v463 = vld [vmem:[%s431 + $0x58] sm:$0xff]
      %v464 = vld [vmem:[%s431 + $0x60] sm:$0xff]
      %v465 = vld [vmem:[%s431 + $0x68] sm:$0xff]
      %v466 = vld [vmem:[%s431 + $0x70] sm:$0xff]
      %v467 = vld [vmem:[%s431 + $0x78] sm:$0xff]
      %v468 = vld [vmem:[%s431 + $0x80] sm:$0xff]
      %v469 = vld [vmem:[%s431 + $0x88] sm:$0xff]
      %v470 = vld [vmem:[%s431 + $0x90] sm:$0xff]
      %v471 = vld [vmem:[%s431 + $0x98] sm:$0xff]
      %v472 = vld [vmem:[%s431 + $0xa0] sm:$0xff]
      %v473 = vld [vmem:[%s431 + $0xa8] sm:$0xff]
      %v474 = vld [vmem:[%s431 + $0xb0] sm:$0xff]
      %v475 = vld [vmem:[%s431 + $0xb8] sm:$0xff]
      %v476 = vld [vmem:[%s431 + $0xc0] sm:$0xff]
      %v477 = vld [vmem:[%s431 + $0xc8] sm:$0xff]
      %v478 = vld [vmem:[%s431 + $0xd0] sm:$0xff]
      %v479 = vld [vmem:[%s431 + $0xd8] sm:$0xff]
      %v480 = vld [vmem:[%s431 + $0xe0] sm:$0xff]
      %v481 = vld [vmem:[%s431 + $0xe8] sm:$0xff]
      %v482 = vld [vmem:[%s431 + $0xf0] sm:$0xff]
      %v483 = vld [vmem:[%s431 + $0xf8] sm:$0xff]
      %v484 = vpack.c.bf16 %v453, %v452
      %v485 = vpack.c.bf16 %v455, %v454
      %v486 = vpack.c.bf16 %v457, %v456
      %v487 = vpack.c.bf16 %v459, %v458
      %v488 = vpack.c.bf16 %v461, %v460
      %v489 = vpack.c.bf16 %v463, %v462
      %v490 = vpack.c.bf16 %v465, %v464
      %v491 = vpack.c.bf16 %v467, %v466
      %v492 = vpack.c.bf16 %v469, %v468
      %v493 = vpack.c.bf16 %v471, %v470
      %v494 = vpack.c.bf16 %v473, %v472
      %v495 = vpack.c.bf16 %v475, %v474
      %v496 = vpack.c.bf16 %v477, %v476
      %v497 = vpack.c.bf16 %v479, %v478
      %v498 = vpack.c.bf16 %v481, %v480
      %v499 = vpack.c.bf16 %v483, %v482
      %v500 = vld [vmem:[%s2] sm:$0xf]
      %v501 = vld [vmem:[%s2 + $0x4] sm:$0xf]
      %v502 = vld [vmem:[%s2 + $0x8] sm:$0xf]
      %v503 = vld [vmem:[%s2 + $0xc] sm:$0xf]
      %v504 = vld [vmem:[%s2 + $0x10] sm:$0xf]
      %v505 = vld [vmem:[%s2 + $0x14] sm:$0xf]
      %v506 = vld [vmem:[%s2 + $0x18] sm:$0xf]
      %v507 = vld [vmem:[%s2 + $0x1c] sm:$0xf]
      %v508 = vld [vmem:[%s3] sm:$0x1]
      %v510 = vperm.slane %v508, 0
      %v520 = vunpack.c.l.b16 %v500
      %v521 = vunpack.c.l.b16 %v501
      %v522 = vunpack.c.l.b16 %v502
      %v523 = vunpack.c.l.b16 %v503
      %v524 = vunpack.c.l.b16 %v504
      %v525 = vunpack.c.l.b16 %v505
      %v526 = vunpack.c.l.b16 %v506
      %v527 = vunpack.c.l.b16 %v507
      %v528 = vpack.c.b16 %v521, %v520
      %v529 = vpack.c.b16 %v523, %v522
      %v530 = vpack.c.b16 %v525, %v524
      %v531 = vpack.c.b16 %v527, %v526
      %vm536 = vcmask 523264
      %v538 = vsel %vm536, %v484, 0
      %v541 = vsel %vm536, %v485, 0
      %v544 = vsel %vm536, %v486, 0
      %v547 = vsel %vm536, %v487, 0
      %v550 = vsel %vm536, %v488, 0
      %v553 = vsel %vm536, %v489, 0
      %v556 = vsel %vm536, %v490, 0
      %v559 = vsel %vm536, %v491, 0
      %v562 = vsel %vm536, %v492, 0
      %v565 = vsel %vm536, %v493, 0
      %v568 = vsel %vm536, %v494, 0
      %v571 = vsel %vm536, %v495, 0
      %v574 = vsel %vm536, %v496, 0
      %v577 = vsel %vm536, %v497, 0
      %v580 = vsel %vm536, %v498, 0
      %v583 = vsel %vm536, %v499, 0
      %585 = vmatpush.bf16.msra.mxu0 0
      %586 = vmatpush.bf16.msra.mxu0 0
      %587 = vmatpush.bf16.msra.mxu0 0
      %588 = vmatpush.bf16.msra.mxu0 0
      %589 = vmatpush.bf16.msra.mxu0 %v531
      %590 = vmatpush.bf16.msra.mxu0 %v530
      %591 = vmatpush.bf16.msra.mxu0 %v529
      %592 = vmatpush.bf16.msra.mxu0 %v528
      %593 = vmatmul.bf16.gmra.mxu0 %v538
      %v594 = vpop.f32.mrf.mxu0
      %v595 = vadd.f32 %v510, %v594
      %v596 = vpop.f32.mrf.mxu0
      %v597 = vadd.f32 %v510, %v596
      %598 = vmatmul.bf16.gmra.mxu0 %v541
      %v599 = vpop.f32.mrf.mxu0
      %v600 = vadd.f32 %v510, %v599
      %v601 = vpop.f32.mrf.mxu0
      %v602 = vadd.f32 %v510, %v601
      %603 = vmatmul.bf16.gmra.mxu0 %v544
      %v604 = vpop.f32.mrf.mxu0
      %v605 = vadd.f32 %v510, %v604
      %v606 = vpop.f32.mrf.mxu0
      %v607 = vadd.f32 %v510, %v606
      %608 = vmatmul.bf16.gmra.mxu0 %v547
      %v609 = vpop.f32.mrf.mxu0
      %v610 = vadd.f32 %v510, %v609
      %v611 = vpop.f32.mrf.mxu0
      %v612 = vadd.f32 %v510, %v611
      %613 = vmatmul.bf16.gmra.mxu0 %v550
      %v614 = vpop.f32.mrf.mxu0
      %v615 = vadd.f32 %v510, %v614
      %v616 = vpop.f32.mrf.mxu0
      %v617 = vadd.f32 %v510, %v616
      %618 = vmatmul.bf16.gmra.mxu0 %v553
      %v619 = vpop.f32.mrf.mxu0
      %v620 = vadd.f32 %v510, %v619
      %v621 = vpop.f32.mrf.mxu0
      %v622 = vadd.f32 %v510, %v621
      %623 = vmatmul.bf16.gmra.mxu0 %v556
      %v624 = vpop.f32.mrf.mxu0
      %v625 = vadd.f32 %v510, %v624
      %v626 = vpop.f32.mrf.mxu0
      %v627 = vadd.f32 %v510, %v626
      %628 = vmatmul.bf16.gmra.mxu0 %v559
      %v629 = vpop.f32.mrf.mxu0
      %v630 = vadd.f32 %v510, %v629
      %v631 = vpop.f32.mrf.mxu0
      %v632 = vadd.f32 %v510, %v631
      %633 = vmatmul.bf16.gmra.mxu0 %v562
      %v634 = vpop.f32.mrf.mxu0
      %v635 = vadd.f32 %v510, %v634
      %v636 = vpop.f32.mrf.mxu0
      %v637 = vadd.f32 %v510, %v636
      %638 = vmatmul.bf16.gmra.mxu0 %v565
      %v639 = vpop.f32.mrf.mxu0
      %v640 = vadd.f32 %v510, %v639
      %v641 = vpop.f32.mrf.mxu0
      %v642 = vadd.f32 %v510, %v641
      %643 = vmatmul.bf16.gmra.mxu0 %v568
      %v644 = vpop.f32.mrf.mxu0
      %v645 = vadd.f32 %v510, %v644
      %v646 = vpop.f32.mrf.mxu0
      %v647 = vadd.f32 %v510, %v646
      %648 = vmatmul.bf16.gmra.mxu0 %v571
      %v649 = vpop.f32.mrf.mxu0
      %v650 = vadd.f32 %v510, %v649
      %v651 = vpop.f32.mrf.mxu0
      %v652 = vadd.f32 %v510, %v651
      %653 = vmatmul.bf16.gmra.mxu0 %v574
      %v654 = vpop.f32.mrf.mxu0
      %v655 = vadd.f32 %v510, %v654
      %v656 = vpop.f32.mrf.mxu0
      %v657 = vadd.f32 %v510, %v656
      %658 = vmatmul.bf16.gmra.mxu0 %v577
      %v659 = vpop.f32.mrf.mxu0
      %v660 = vadd.f32 %v510, %v659
      %v661 = vpop.f32.mrf.mxu0
      %v662 = vadd.f32 %v510, %v661
      %663 = vmatmul.bf16.gmra.mxu0 %v580
      %v664 = vpop.f32.mrf.mxu0
      %v665 = vadd.f32 %v510, %v664
      %v666 = vpop.f32.mrf.mxu0
      %v667 = vadd.f32 %v510, %v666
      %668 = vmatmul.bf16.gmra.mxu0 %v583
      %v669 = vpop.f32.mrf.mxu0
      %v670 = vadd.f32 %v510, %v669
      %v671 = vpop.f32.mrf.mxu0
      %v672 = vadd.f32 %v510, %v671
      %673 = vdwg.mxu0
      %v674 = vmax.f32 %v595, 0.0
      %v675 = vmax.f32 %v597, 0.0
      %v676 = vmax.f32 %v600, 0.0
      %v677 = vmax.f32 %v602, 0.0
      %v678 = vmax.f32 %v605, 0.0
      %v679 = vmax.f32 %v607, 0.0
      %v680 = vmax.f32 %v610, 0.0
      %v681 = vmax.f32 %v612, 0.0
      %v682 = vmax.f32 %v615, 0.0
      %v683 = vmax.f32 %v617, 0.0
      %v684 = vmax.f32 %v620, 0.0
      %v685 = vmax.f32 %v622, 0.0
      %v686 = vmax.f32 %v625, 0.0
      %v687 = vmax.f32 %v627, 0.0
      %v688 = vmax.f32 %v630, 0.0
      %v689 = vmax.f32 %v632, 0.0
      %v690 = vmax.f32 %v635, 0.0
      %v691 = vmax.f32 %v637, 0.0
      %v692 = vmax.f32 %v640, 0.0
      %v693 = vmax.f32 %v642, 0.0
      %v694 = vmax.f32 %v645, 0.0
      %v695 = vmax.f32 %v647, 0.0
      %v696 = vmax.f32 %v650, 0.0
      %v697 = vmax.f32 %v652, 0.0
      %v698 = vmax.f32 %v655, 0.0
      %v699 = vmax.f32 %v657, 0.0
      %v700 = vmax.f32 %v660, 0.0
      %v701 = vmax.f32 %v662, 0.0
      %v702 = vmax.f32 %v665, 0.0
      %v703 = vmax.f32 %v667, 0.0
      %v704 = vmax.f32 %v670, 0.0
      %v705 = vmax.f32 %v672, 0.0
      %v706 = vlaneseq
      %v707 = vshrl.u32 %v706, 7
      %v708 = vadd.s32 %v707, 8
      %v709 = vadd.s32 %v707, 16
      %v710 = vadd.s32 %v707, 24
      %v711 = vadd.s32 %v707, 32
      %v712 = vadd.s32 %v707, 40
      %v713 = vadd.s32 %v707, 48
      %v714 = vadd.s32 %v707, 56
      %v715 = vadd.s32 %v707, 64
      %v716 = vadd.s32 %v707, 72
      %v717 = vadd.s32 %v707, 80
      %v718 = vadd.s32 %v707, 88
      %v719 = vadd.s32 %v707, 96
      %v720 = vadd.s32 %v707, 104
      %v721 = vadd.s32 %v707, 112
      %v722 = vadd.s32 %v707, 120
      %v723 = vadd.s32 %v707, 128
      %v724 = vadd.s32 %v707, 136
      %v725 = vadd.s32 %v707, 144
      %v726 = vadd.s32 %v707, 152
      %v727 = vadd.s32 %v707, 160
      %v728 = vadd.s32 %v707, 168
      %v729 = vadd.s32 %v707, 176
      %v730 = vadd.s32 %v707, 184
      %v731 = vadd.s32 %v707, 192
      %v732 = vadd.s32 %v707, 200
      %v733 = vadd.s32 %v707, 208
      %v734 = vadd.s32 %v707, 216
      %v735 = vadd.s32 %v707, 224
      %v736 = vadd.s32 %v707, 232
      %v737 = vadd.s32 %v707, 240
      %v738 = vadd.s32 %v707, 248
      %s739 = smul.u32 %s25, 256
      %v740 = vstv %s739
      %v741 = vadd.s32 %v707, %v740
      %v742 = vadd.s32 %v708, %v740
      %v743 = vadd.s32 %v709, %v740
      %v744 = vadd.s32 %v710, %v740
      %v745 = vadd.s32 %v711, %v740
      %v746 = vadd.s32 %v712, %v740
      %v747 = vadd.s32 %v713, %v740
      %v748 = vadd.s32 %v714, %v740
      %v749 = vadd.s32 %v715, %v740
      %v750 = vadd.s32 %v716, %v740
      %v751 = vadd.s32 %v717, %v740
      %v752 = vadd.s32 %v718, %v740
      %v753 = vadd.s32 %v719, %v740
      %v754 = vadd.s32 %v720, %v740
      %v755 = vadd.s32 %v721, %v740
      %v756 = vadd.s32 %v722, %v740
      %v757 = vadd.s32 %v723, %v740
      %v758 = vadd.s32 %v724, %v740
      %v759 = vadd.s32 %v725, %v740
      %v760 = vadd.s32 %v726, %v740
      %v761 = vadd.s32 %v727, %v740
      %v762 = vadd.s32 %v728, %v740
      %v763 = vadd.s32 %v729, %v740
      %v764 = vadd.s32 %v730, %v740
      %v765 = vadd.s32 %v731, %v740
      %v766 = vadd.s32 %v732, %v740
      %v767 = vadd.s32 %v733, %v740
      %v768 = vadd.s32 %v734, %v740
      %v769 = vadd.s32 %v735, %v740
      %v770 = vadd.s32 %v736, %v740
      %v771 = vadd.s32 %v737, %v740
      %v772 = vadd.s32 %v738, %v740
      %vm773 = vcmp.lt.s32.totalorder %v741, 384
      %vm774 = vcmp.lt.s32.totalorder %v742, 384
      %vm775 = vcmp.lt.s32.totalorder %v743, 384
      %vm776 = vcmp.lt.s32.totalorder %v744, 384
      %vm777 = vcmp.lt.s32.totalorder %v745, 384
      %vm778 = vcmp.lt.s32.totalorder %v746, 384
      %vm779 = vcmp.lt.s32.totalorder %v747, 384
      %vm780 = vcmp.lt.s32.totalorder %v748, 384
      %vm781 = vcmp.lt.s32.totalorder %v749, 384
      %vm782 = vcmp.lt.s32.totalorder %v750, 384
      %vm783 = vcmp.lt.s32.totalorder %v751, 384
      %vm784 = vcmp.lt.s32.totalorder %v752, 384
      %vm785 = vcmp.lt.s32.totalorder %v753, 384
      %vm786 = vcmp.lt.s32.totalorder %v754, 384
      %vm787 = vcmp.lt.s32.totalorder %v755, 384
      %vm788 = vcmp.lt.s32.totalorder %v756, 384
      %vm789 = vcmp.lt.s32.totalorder %v757, 384
      %vm790 = vcmp.lt.s32.totalorder %v758, 384
      %vm791 = vcmp.lt.s32.totalorder %v759, 384
      %vm792 = vcmp.lt.s32.totalorder %v760, 384
      %vm793 = vcmp.lt.s32.totalorder %v761, 384
      %vm794 = vcmp.lt.s32.totalorder %v762, 384
      %vm795 = vcmp.lt.s32.totalorder %v763, 384
      %vm796 = vcmp.lt.s32.totalorder %v764, 384
      %vm797 = vcmp.lt.s32.totalorder %v765, 384
      %vm798 = vcmp.lt.s32.totalorder %v766, 384
      %vm799 = vcmp.lt.s32.totalorder %v767, 384
      %vm800 = vcmp.lt.s32.totalorder %v768, 384
      %vm801 = vcmp.lt.s32.totalorder %v769, 384
      %vm802 = vcmp.lt.s32.totalorder %v770, 384
      %vm803 = vcmp.lt.s32.totalorder %v771, 384
      %vm804 = vcmp.lt.s32.totalorder %v772, 384
      %v805 = vsel %vm773, 1, 0
      %v806 = vsel %vm774, 1, 0
      %v807 = vsel %vm775, 1, 0
      %v808 = vsel %vm776, 1, 0
      %v809 = vsel %vm777, 1, 0
      %v810 = vsel %vm778, 1, 0
      %v811 = vsel %vm779, 1, 0
      %v812 = vsel %vm780, 1, 0
      %v813 = vsel %vm781, 1, 0
      %v814 = vsel %vm782, 1, 0
      %v815 = vsel %vm783, 1, 0
      %v816 = vsel %vm784, 1, 0
      %v817 = vsel %vm785, 1, 0
      %v818 = vsel %vm786, 1, 0
      %v819 = vsel %vm787, 1, 0
      %v820 = vsel %vm788, 1, 0
      %v821 = vsel %vm789, 1, 0
      %v822 = vsel %vm790, 1, 0
      %v823 = vsel %vm791, 1, 0
      %v824 = vsel %vm792, 1, 0
      %v825 = vsel %vm793, 1, 0
      %v826 = vsel %vm794, 1, 0
      %v827 = vsel %vm795, 1, 0
      %v828 = vsel %vm796, 1, 0
      %v829 = vsel %vm797, 1, 0
      %v830 = vsel %vm798, 1, 0
      %v831 = vsel %vm799, 1, 0
      %v832 = vsel %vm800, 1, 0
      %v833 = vsel %vm801, 1, 0
      %v834 = vsel %vm802, 1, 0
      %v835 = vsel %vm803, 1, 0
      %v836 = vsel %vm804, 1, 0
      %vm837 = vcmp.eq.s32.totalorder %v805, 1
      %vm838 = vcmp.eq.s32.totalorder %v806, 1
      %vm839 = vcmp.eq.s32.totalorder %v807, 1
      %vm840 = vcmp.eq.s32.totalorder %v808, 1
      %vm841 = vcmp.eq.s32.totalorder %v809, 1
      %vm842 = vcmp.eq.s32.totalorder %v810, 1
      %vm843 = vcmp.eq.s32.totalorder %v811, 1
      %vm844 = vcmp.eq.s32.totalorder %v812, 1
      %vm845 = vcmp.eq.s32.totalorder %v813, 1
      %vm846 = vcmp.eq.s32.totalorder %v814, 1
      %vm847 = vcmp.eq.s32.totalorder %v815, 1
      %vm848 = vcmp.eq.s32.totalorder %v816, 1
      %vm849 = vcmp.eq.s32.totalorder %v817, 1
      %vm850 = vcmp.eq.s32.totalorder %v818, 1
      %vm851 = vcmp.eq.s32.totalorder %v819, 1
      %vm852 = vcmp.eq.s32.totalorder %v820, 1
      %vm853 = vcmp.eq.s32.totalorder %v821, 1
      %vm854 = vcmp.eq.s32.totalorder %v822, 1
      %vm855 = vcmp.eq.s32.totalorder %v823, 1
      %vm856 = vcmp.eq.s32.totalorder %v824, 1
      %vm857 = vcmp.eq.s32.totalorder %v825, 1
      %vm858 = vcmp.eq.s32.totalorder %v826, 1
      %vm859 = vcmp.eq.s32.totalorder %v827, 1
      %vm860 = vcmp.eq.s32.totalorder %v828, 1
      %vm861 = vcmp.eq.s32.totalorder %v829, 1
      %vm862 = vcmp.eq.s32.totalorder %v830, 1
      %vm863 = vcmp.eq.s32.totalorder %v831, 1
      %vm864 = vcmp.eq.s32.totalorder %v832, 1
      %vm865 = vcmp.eq.s32.totalorder %v833, 1
      %vm866 = vcmp.eq.s32.totalorder %v834, 1
      %vm867 = vcmp.eq.s32.totalorder %v835, 1
      %vm868 = vcmp.eq.s32.totalorder %v836, 1
      %v869 = vsel %vm837, %v674, 0.0
      %v870 = vsel %vm838, %v675, 0.0
      %v871 = vsel %vm839, %v676, 0.0
      %v872 = vsel %vm840, %v677, 0.0
      %v873 = vsel %vm841, %v678, 0.0
      %v874 = vsel %vm842, %v679, 0.0
      %v875 = vsel %vm843, %v680, 0.0
      %v876 = vsel %vm844, %v681, 0.0
      %v877 = vsel %vm845, %v682, 0.0
      %v878 = vsel %vm846, %v683, 0.0
      %v879 = vsel %vm847, %v684, 0.0
      %v880 = vsel %vm848, %v685, 0.0
      %v881 = vsel %vm849, %v686, 0.0
      %v882 = vsel %vm850, %v687, 0.0
      %v883 = vsel %vm851, %v688, 0.0
      %v884 = vsel %vm852, %v689, 0.0
      %v885 = vsel %vm853, %v690, 0.0
      %v886 = vsel %vm854, %v691, 0.0
      %v887 = vsel %vm855, %v692, 0.0
      %v888 = vsel %vm856, %v693, 0.0
      %v889 = vsel %vm857, %v694, 0.0
      %v890 = vsel %vm858, %v695, 0.0
      %v891 = vsel %vm859, %v696, 0.0
      %v892 = vsel %vm860, %v697, 0.0
      %v893 = vsel %vm861, %v698, 0.0
      %v894 = vsel %vm862, %v699, 0.0
      %v895 = vsel %vm863, %v700, 0.0
      %v896 = vsel %vm864, %v701, 0.0
      %v897 = vsel %vm865, %v702, 0.0
      %v898 = vsel %vm866, %v703, 0.0
      %v899 = vsel %vm867, %v704, 0.0
      %v900 = vsel %vm868, %v705, 0.0
      %v901 = vpack.c.bf16 %v870, %v869
      %v902 = vpack.c.bf16 %v872, %v871
      %v903 = vpack.c.bf16 %v874, %v873
      %v904 = vpack.c.bf16 %v876, %v875
      %v905 = vpack.c.bf16 %v878, %v877
      %v906 = vpack.c.bf16 %v880, %v879
      %v907 = vpack.c.bf16 %v882, %v881
      %v908 = vpack.c.bf16 %v884, %v883
      %v909 = vpack.c.bf16 %v886, %v885
      %v910 = vpack.c.bf16 %v888, %v887
      %v911 = vpack.c.bf16 %v890, %v889
      %v912 = vpack.c.bf16 %v892, %v891
      %v913 = vpack.c.bf16 %v894, %v893
      %v914 = vpack.c.bf16 %v896, %v895
      %v915 = vpack.c.bf16 %v898, %v897
      %v916 = vpack.c.bf16 %v900, %v899
      %v917 = vld [vmem:[%s4] sm:$0xf]
      %v918 = vld [vmem:[%s4 + $0x4] sm:$0xf]
      %v919 = vld [vmem:[%s4 + $0x8] sm:$0xf]
      %v920 = vld [vmem:[%s4 + $0xc] sm:$0xf]
      %v921 = vld [vmem:[%s5] sm:$0x1]
      %v923 = vperm.slane %v921, 0
      %v929 = vunpack.c.l.b16 %v917
      %v930 = vunpack.c.l.b16 %v918
      %v931 = vunpack.c.l.b16 %v919
      %v932 = vunpack.c.l.b16 %v920
      %v933 = vpack.c.b16 %v930, %v929
      %v934 = vpack.c.b16 %v932, %v931
      %vm937 = vcmask 261120
      %v939 = vsel %vm937, %v901, 0
      %v942 = vsel %vm937, %v902, 0
      %v945 = vsel %vm937, %v903, 0
      %v948 = vsel %vm937, %v904, 0
      %v951 = vsel %vm937, %v905, 0
      %v954 = vsel %vm937, %v906, 0
      %v957 = vsel %vm937, %v907, 0
      %v960 = vsel %vm937, %v908, 0
      %v963 = vsel %vm937, %v909, 0
      %v966 = vsel %vm937, %v910, 0
      %v969 = vsel %vm937, %v911, 0
      %v972 = vsel %vm937, %v912, 0
      %v975 = vsel %vm937, %v913, 0
      %v978 = vsel %vm937, %v914, 0
      %v981 = vsel %vm937, %v915, 0
      %v984 = vsel %vm937, %v916, 0
      %986 = vmatpush.bf16.msra.mxu0 0
      %987 = vmatpush.bf16.msra.mxu0 0
      %988 = vmatpush.bf16.msra.mxu0 0
      %989 = vmatpush.bf16.msra.mxu0 0
      %990 = vmatpush.bf16.msra.mxu0 0
      %991 = vmatpush.bf16.msra.mxu0 0
      %992 = vmatpush.bf16.msra.mxu0 %v934
      %993 = vmatpush.bf16.msra.mxu0 %v933
      %994 = vmatmul.bf16.gmra.mxu0 %v939
      %v995 = vpop.f32.mrf.mxu0
      %v996 = vadd.f32 %v923, %v995
      %v997 = vpop.f32.mrf.mxu0
      %v998 = vadd.f32 %v923, %v997
      %999 = vmatmul.bf16.gmra.mxu0 %v942
      %v1000 = vpop.f32.mrf.mxu0
      %v1001 = vadd.f32 %v923, %v1000
      %v1002 = vpop.f32.mrf.mxu0
      %v1003 = vadd.f32 %v923, %v1002
      %1004 = vmatmul.bf16.gmra.mxu0 %v945
      %v1005 = vpop.f32.mrf.mxu0
      %v1006 = vadd.f32 %v923, %v1005
      %v1007 = vpop.f32.mrf.mxu0
      %v1008 = vadd.f32 %v923, %v1007
      %1009 = vmatmul.bf16.gmra.mxu0 %v948
      %v1010 = vpop.f32.mrf.mxu0
      %v1011 = vadd.f32 %v923, %v1010
      %v1012 = vpop.f32.mrf.mxu0
      %v1013 = vadd.f32 %v923, %v1012
      %1014 = vmatmul.bf16.gmra.mxu0 %v951
      %v1015 = vpop.f32.mrf.mxu0
      %v1016 = vadd.f32 %v923, %v1015
      %v1017 = vpop.f32.mrf.mxu0
      %v1018 = vadd.f32 %v923, %v1017
      %1019 = vmatmul.bf16.gmra.mxu0 %v954
      %v1020 = vpop.f32.mrf.mxu0
      %v1021 = vadd.f32 %v923, %v1020
      %v1022 = vpop.f32.mrf.mxu0
      %v1023 = vadd.f32 %v923, %v1022
      %1024 = vmatmul.bf16.gmra.mxu0 %v957
      %v1025 = vpop.f32.mrf.mxu0
      %v1026 = vadd.f32 %v923, %v1025
      %v1027 = vpop.f32.mrf.mxu0
      %v1028 = vadd.f32 %v923, %v1027
      %1029 = vmatmul.bf16.gmra.mxu0 %v960
      %v1030 = vpop.f32.mrf.mxu0
      %v1031 = vadd.f32 %v923, %v1030
      %v1032 = vpop.f32.mrf.mxu0
      %v1033 = vadd.f32 %v923, %v1032
      %1034 = vmatmul.bf16.gmra.mxu0 %v963
      %v1035 = vpop.f32.mrf.mxu0
      %v1036 = vadd.f32 %v923, %v1035
      %v1037 = vpop.f32.mrf.mxu0
      %v1038 = vadd.f32 %v923, %v1037
      %1039 = vmatmul.bf16.gmra.mxu0 %v966
      %v1040 = vpop.f32.mrf.mxu0
      %v1041 = vadd.f32 %v923, %v1040
      %v1042 = vpop.f32.mrf.mxu0
      %v1043 = vadd.f32 %v923, %v1042
      %1044 = vmatmul.bf16.gmra.mxu0 %v969
      %v1045 = vpop.f32.mrf.mxu0
      %v1046 = vadd.f32 %v923, %v1045
      %v1047 = vpop.f32.mrf.mxu0
      %v1048 = vadd.f32 %v923, %v1047
      %1049 = vmatmul.bf16.gmra.mxu0 %v972
      %v1050 = vpop.f32.mrf.mxu0
      %v1051 = vadd.f32 %v923, %v1050
      %v1052 = vpop.f32.mrf.mxu0
      %v1053 = vadd.f32 %v923, %v1052
      %1054 = vmatmul.bf16.gmra.mxu0 %v975
      %v1055 = vpop.f32.mrf.mxu0
      %v1056 = vadd.f32 %v923, %v1055
      %v1057 = vpop.f32.mrf.mxu0
      %v1058 = vadd.f32 %v923, %v1057
      %1059 = vmatmul.bf16.gmra.mxu0 %v978
      %v1060 = vpop.f32.mrf.mxu0
      %v1061 = vadd.f32 %v923, %v1060
      %v1062 = vpop.f32.mrf.mxu0
      %v1063 = vadd.f32 %v923, %v1062
      %1064 = vmatmul.bf16.gmra.mxu0 %v981
      %v1065 = vpop.f32.mrf.mxu0
      %v1066 = vadd.f32 %v923, %v1065
      %v1067 = vpop.f32.mrf.mxu0
      %v1068 = vadd.f32 %v923, %v1067
      %1069 = vmatmul.bf16.gmra.mxu0 %v984
      %v1070 = vpop.f32.mrf.mxu0
      %v1071 = vadd.f32 %v923, %v1070
      %v1072 = vpop.f32.mrf.mxu0
      %v1073 = vadd.f32 %v923, %v1072
      %1074 = vdwg.mxu0
      %v1075 = vld [vmem:[%s6] sm:$0xf]
      %v1076 = vld [vmem:[%s6 + $0x4] sm:$0xf]
      %v1077 = vld [vmem:[%s6 + $0x8] sm:$0xf]
      %v1078 = vld [vmem:[%s6 + $0xc] sm:$0xf]
      %v1079 = vld [vmem:[%s7] sm:$0x1]
      %v1081 = vperm.slane %v1079, 0
      %v1087 = vunpack.c.l.b16 %v1075
      %v1088 = vunpack.c.l.b16 %v1076
      %v1089 = vunpack.c.l.b16 %v1077
      %v1090 = vunpack.c.l.b16 %v1078
      %v1091 = vpack.c.b16 %v1088, %v1087
      %v1092 = vpack.c.b16 %v1090, %v1089
      %1095 = vmatpush.bf16.msra.mxu0 0
      %1096 = vmatpush.bf16.msra.mxu0 0
      %1097 = vmatpush.bf16.msra.mxu0 0
      %1098 = vmatpush.bf16.msra.mxu0 0
      %1099 = vmatpush.bf16.msra.mxu0 0
      %1100 = vmatpush.bf16.msra.mxu0 0
      %1101 = vmatpush.bf16.msra.mxu0 %v1092
      %1102 = vmatpush.bf16.msra.mxu0 %v1091
      %1103 = vmatmul.bf16.gmra.mxu0 %v939
      %v1104 = vpop.f32.mrf.mxu0
      %v1105 = vadd.f32 %v1081, %v1104
      %v1106 = vpop.f32.mrf.mxu0
      %v1107 = vadd.f32 %v1081, %v1106
      %1108 = vmatmul.bf16.gmra.mxu0 %v942
      %v1109 = vpop.f32.mrf.mxu0
      %v1110 = vadd.f32 %v1081, %v1109
      %v1111 = vpop.f32.mrf.mxu0
      %v1112 = vadd.f32 %v1081, %v1111
      %1113 = vmatmul.bf16.gmra.mxu0 %v945
      %v1114 = vpop.f32.mrf.mxu0
      %v1115 = vadd.f32 %v1081, %v1114
      %v1116 = vpop.f32.mrf.mxu0
      %v1117 = vadd.f32 %v1081, %v1116
      %1118 = vmatmul.bf16.gmra.mxu0 %v948
      %v1119 = vpop.f32.mrf.mxu0
      %v1120 = vadd.f32 %v1081, %v1119
      %v1121 = vpop.f32.mrf.mxu0
      %v1122 = vadd.f32 %v1081, %v1121
      %1123 = vmatmul.bf16.gmra.mxu0 %v951
      %v1124 = vpop.f32.mrf.mxu0
      %v1125 = vadd.f32 %v1081, %v1124
      %v1126 = vpop.f32.mrf.mxu0
      %v1127 = vadd.f32 %v1081, %v1126
      %1128 = vmatmul.bf16.gmra.mxu0 %v954
      %v1129 = vpop.f32.mrf.mxu0
      %v1130 = vadd.f32 %v1081, %v1129
      %v1131 = vpop.f32.mrf.mxu0
      %v1132 = vadd.f32 %v1081, %v1131
      %1133 = vmatmul.bf16.gmra.mxu0 %v957
      %v1134 = vpop.f32.mrf.mxu0
      %v1135 = vadd.f32 %v1081, %v1134
      %v1136 = vpop.f32.mrf.mxu0
      %v1137 = vadd.f32 %v1081, %v1136
      %1138 = vmatmul.bf16.gmra.mxu0 %v960
      %v1139 = vpop.f32.mrf.mxu0
      %v1140 = vadd.f32 %v1081, %v1139
      %v1141 = vpop.f32.mrf.mxu0
      %v1142 = vadd.f32 %v1081, %v1141
      %1143 = vmatmul.bf16.gmra.mxu0 %v963
      %v1144 = vpop.f32.mrf.mxu0
      %v1145 = vadd.f32 %v1081, %v1144
      %v1146 = vpop.f32.mrf.mxu0
      %v1147 = vadd.f32 %v1081, %v1146
      %1148 = vmatmul.bf16.gmra.mxu0 %v966
      %v1149 = vpop.f32.mrf.mxu0
      %v1150 = vadd.f32 %v1081, %v1149
      %v1151 = vpop.f32.mrf.mxu0
      %v1152 = vadd.f32 %v1081, %v1151
      %1153 = vmatmul.bf16.gmra.mxu0 %v969
      %v1154 = vpop.f32.mrf.mxu0
      %v1155 = vadd.f32 %v1081, %v1154
      %v1156 = vpop.f32.mrf.mxu0
      %v1157 = vadd.f32 %v1081, %v1156
      %1158 = vmatmul.bf16.gmra.mxu0 %v972
      %v1159 = vpop.f32.mrf.mxu0
      %v1160 = vadd.f32 %v1081, %v1159
      %v1161 = vpop.f32.mrf.mxu0
      %v1162 = vadd.f32 %v1081, %v1161
      %1163 = vmatmul.bf16.gmra.mxu0 %v975
      %v1164 = vpop.f32.mrf.mxu0
      %v1165 = vadd.f32 %v1081, %v1164
      %v1166 = vpop.f32.mrf.mxu0
      %v1167 = vadd.f32 %v1081, %v1166
      %1168 = vmatmul.bf16.gmra.mxu0 %v978
      %v1169 = vpop.f32.mrf.mxu0
      %v1170 = vadd.f32 %v1081, %v1169
      %v1171 = vpop.f32.mrf.mxu0
      %v1172 = vadd.f32 %v1081, %v1171
      %1173 = vmatmul.bf16.gmra.mxu0 %v981
      %v1174 = vpop.f32.mrf.mxu0
      %v1175 = vadd.f32 %v1081, %v1174
      %v1176 = vpop.f32.mrf.mxu0
      %v1177 = vadd.f32 %v1081, %v1176
      %1178 = vmatmul.bf16.gmra.mxu0 %v984
      %v1179 = vpop.f32.mrf.mxu0
      %v1180 = vadd.f32 %v1081, %v1179
      %v1181 = vpop.f32.mrf.mxu0
      %v1182 = vadd.f32 %v1081, %v1181
      %1183 = vdwg.mxu0
      %v1184 = vtanh.pop %v996
      %v1185 = vtanh.pop %v998
      %v1186 = vtanh.pop %v1001
      %v1187 = vtanh.pop %v1003
      %v1188 = vtanh.pop %v1006
      %v1189 = vtanh.pop %v1008
      %v1190 = vtanh.pop %v1011
      %v1191 = vtanh.pop %v1013
      %v1192 = vtanh.pop %v1016
      %v1193 = vtanh.pop %v1018
      %v1194 = vtanh.pop %v1021
      %v1195 = vtanh.pop %v1023
      %v1196 = vtanh.pop %v1026
      %v1197 = vtanh.pop %v1028
      %v1198 = vtanh.pop %v1031
      %v1199 = vtanh.pop %v1033
      %v1200 = vtanh.pop %v1036
      %v1201 = vtanh.pop %v1038
      %v1202 = vtanh.pop %v1041
      %v1203 = vtanh.pop %v1043
      %v1204 = vtanh.pop %v1046
      %v1205 = vtanh.pop %v1048
      %v1206 = vtanh.pop %v1051
      %v1207 = vtanh.pop %v1053
      %v1208 = vtanh.pop %v1056
      %v1209 = vtanh.pop %v1058
      %v1210 = vtanh.pop %v1061
      %v1211 = vtanh.pop %v1063
      %v1212 = vtanh.pop %v1066
      %v1213 = vtanh.pop %v1068
      %v1214 = vtanh.pop %v1071
      %v1215 = vtanh.pop %v1073
      %v1216 = vxor.u32 %v1105, 2147483648
      %v1217 = vxor.u32 %v1107, 2147483648
      %v1218 = vxor.u32 %v1110, 2147483648
      %v1219 = vxor.u32 %v1112, 2147483648
      %v1220 = vxor.u32 %v1115, 2147483648
      %v1221 = vxor.u32 %v1117, 2147483648
      %v1222 = vxor.u32 %v1120, 2147483648
      %v1223 = vxor.u32 %v1122, 2147483648
      %v1224 = vxor.u32 %v1125, 2147483648
      %v1225 = vxor.u32 %v1127, 2147483648
      %v1226 = vxor.u32 %v1130, 2147483648
      %v1227 = vxor.u32 %v1132, 2147483648
      %v1228 = vxor.u32 %v1135, 2147483648
      %v1229 = vxor.u32 %v1137, 2147483648
      %v1230 = vxor.u32 %v1140, 2147483648
      %v1231 = vxor.u32 %v1142, 2147483648
      %v1232 = vxor.u32 %v1145, 2147483648
      %v1233 = vxor.u32 %v1147, 2147483648
      %v1234 = vxor.u32 %v1150, 2147483648
      %v1235 = vxor.u32 %v1152, 2147483648
      %v1236 = vxor.u32 %v1155, 2147483648
      %v1237 = vxor.u32 %v1157, 2147483648
      %v1238 = vxor.u32 %v1160, 2147483648
      %v1239 = vxor.u32 %v1162, 2147483648
      %v1240 = vxor.u32 %v1165, 2147483648
      %v1241 = vxor.u32 %v1167, 2147483648
      %v1242 = vxor.u32 %v1170, 2147483648
      %v1243 = vxor.u32 %v1172, 2147483648
      %v1244 = vxor.u32 %v1175, 2147483648
      %v1245 = vxor.u32 %v1177, 2147483648
      %v1246 = vxor.u32 %v1180, 2147483648
      %v1247 = vxor.u32 %v1182, 2147483648
      %v1248 = vmul.f32 %v1216, 1.442695
      %v1249 = vpow.pop %v1248
      %v1250 = vmul.f32 %v1217, 1.442695
      %v1251 = vpow.pop %v1250
      %v1252 = vmul.f32 %v1218, 1.442695
      %v1253 = vpow.pop %v1252
      %v1254 = vmul.f32 %v1219, 1.442695
      %v1255 = vpow.pop %v1254
      %v1256 = vmul.f32 %v1220, 1.442695
      %v1257 = vpow.pop %v1256
      %v1258 = vmul.f32 %v1221, 1.442695
      %v1259 = vpow.pop %v1258
      %v1260 = vmul.f32 %v1222, 1.442695
      %v1261 = vpow.pop %v1260
      %v1262 = vmul.f32 %v1223, 1.442695
      %v1263 = vpow.pop %v1262
      %v1264 = vmul.f32 %v1224, 1.442695
      %v1265 = vpow.pop %v1264
      %v1266 = vmul.f32 %v1225, 1.442695
      %v1267 = vpow.pop %v1266
      %v1268 = vmul.f32 %v1226, 1.442695
      %v1269 = vpow.pop %v1268
      %v1270 = vmul.f32 %v1227, 1.442695
      %v1271 = vpow.pop %v1270
      %v1272 = vmul.f32 %v1228, 1.442695
      %v1273 = vpow.pop %v1272
      %v1274 = vmul.f32 %v1229, 1.442695
      %v1275 = vpow.pop %v1274
      %v1276 = vmul.f32 %v1230, 1.442695
      %v1277 = vpow.pop %v1276
      %v1278 = vmul.f32 %v1231, 1.442695
      %v1279 = vpow.pop %v1278
      %v1280 = vmul.f32 %v1232, 1.442695
      %v1281 = vpow.pop %v1280
      %v1282 = vmul.f32 %v1233, 1.442695
      %v1283 = vpow.pop %v1282
      %v1284 = vmul.f32 %v1234, 1.442695
      %v1285 = vpow.pop %v1284
      %v1286 = vmul.f32 %v1235, 1.442695
      %v1287 = vpow.pop %v1286
      %v1288 = vmul.f32 %v1236, 1.442695
      %v1289 = vpow.pop %v1288
      %v1290 = vmul.f32 %v1237, 1.442695
      %v1291 = vpow.pop %v1290
      %v1292 = vmul.f32 %v1238, 1.442695
      %v1293 = vpow.pop %v1292
      %v1294 = vmul.f32 %v1239, 1.442695
      %v1295 = vpow.pop %v1294
      %v1296 = vmul.f32 %v1240, 1.442695
      %v1297 = vpow.pop %v1296
      %v1298 = vmul.f32 %v1241, 1.442695
      %v1299 = vpow.pop %v1298
      %v1300 = vmul.f32 %v1242, 1.442695
      %v1301 = vpow.pop %v1300
      %v1302 = vmul.f32 %v1243, 1.442695
      %v1303 = vpow.pop %v1302
      %v1304 = vmul.f32 %v1244, 1.442695
      %v1305 = vpow.pop %v1304
      %v1306 = vmul.f32 %v1245, 1.442695
      %v1307 = vpow.pop %v1306
      %v1308 = vmul.f32 %v1246, 1.442695
      %v1309 = vpow.pop %v1308
      %v1310 = vmul.f32 %v1247, 1.442695
      %v1311 = vpow.pop %v1310
      %v1312 = vadd.f32 %v1249, 1.0
      %v1313 = vadd.f32 %v1251, 1.0
      %v1314 = vadd.f32 %v1253, 1.0
      %v1315 = vadd.f32 %v1255, 1.0
      %v1316 = vadd.f32 %v1257, 1.0
      %v1317 = vadd.f32 %v1259, 1.0
      %v1318 = vadd.f32 %v1261, 1.0
      %v1319 = vadd.f32 %v1263, 1.0
      %v1320 = vadd.f32 %v1265, 1.0
      %v1321 = vadd.f32 %v1267, 1.0
      %v1322 = vadd.f32 %v1269, 1.0
      %v1323 = vadd.f32 %v1271, 1.0
      %v1324 = vadd.f32 %v1273, 1.0
      %v1325 = vadd.f32 %v1275, 1.0
      %v1326 = vadd.f32 %v1277, 1.0
      %v1327 = vadd.f32 %v1279, 1.0
      %v1328 = vadd.f32 %v1281, 1.0
      %v1329 = vadd.f32 %v1283, 1.0
      %v1330 = vadd.f32 %v1285, 1.0
      %v1331 = vadd.f32 %v1287, 1.0
      %v1332 = vadd.f32 %v1289, 1.0
      %v1333 = vadd.f32 %v1291, 1.0
      %v1334 = vadd.f32 %v1293, 1.0
      %v1335 = vadd.f32 %v1295, 1.0
      %v1336 = vadd.f32 %v1297, 1.0
      %v1337 = vadd.f32 %v1299, 1.0
      %v1338 = vadd.f32 %v1301, 1.0
      %v1339 = vadd.f32 %v1303, 1.0
      %v1340 = vadd.f32 %v1305, 1.0
      %v1341 = vadd.f32 %v1307, 1.0
      %v1342 = vadd.f32 %v1309, 1.0
      %v1343 = vadd.f32 %v1311, 1.0
      %v1344 = vrcp.pop %v1312
      %v1345 = vmul.f32 %v1312, %v1344
      %v1346 = vsub.f32 1.0, %v1345
      %v1347 = vmul.f32 %v1344, %v1346
      %v1348 = vadd.f32 %v1344, %v1347
      %vm1349 = vweird.f32 %v1312
      %vm1350 = vweird.f32 %v1344
      %vm1351 = vmor %vm1349, %vm1350
      %v1352 = vsel %vm1351, %v1344, %v1348
      %v1353 = vand.u32 2147483647, %v1312
      %vm1354 = vcmp.eq.f32.partialorder %v1353, 8.507059e+37
      %v1355 = vand.u32 %v1312, 2147483648
      %v1356 = vor.u32 1.1754944e-38, %v1355
      %v1357 = vsel %vm1354, %v1356, %v1352
      %v1358 = vmul.f32 1.0, %v1357
      %v1359 = vrcp.pop %v1313
      %v1360 = vmul.f32 %v1313, %v1359
      %v1361 = vsub.f32 1.0, %v1360
      %v1362 = vmul.f32 %v1359, %v1361
      %v1363 = vadd.f32 %v1359, %v1362
      %vm1364 = vweird.f32 %v1313
      %vm1365 = vweird.f32 %v1359
      %vm1366 = vmor %vm1364, %vm1365
      %v1367 = vsel %vm1366, %v1359, %v1363
      %v1368 = vand.u32 2147483647, %v1313
      %vm1369 = vcmp.eq.f32.partialorder %v1368, 8.507059e+37
      %v1370 = vand.u32 %v1313, 2147483648
      %v1371 = vor.u32 1.1754944e-38, %v1370
      %v1372 = vsel %vm1369, %v1371, %v1367
      %v1373 = vmul.f32 1.0, %v1372
      %v1374 = vrcp.pop %v1314
      %v1375 = vmul.f32 %v1314, %v1374
      %v1376 = vsub.f32 1.0, %v1375
      %v1377 = vmul.f32 %v1374, %v1376
      %v1378 = vadd.f32 %v1374, %v1377
      %vm1379 = vweird.f32 %v1314
      %vm1380 = vweird.f32 %v1374
      %vm1381 = vmor %vm1379, %vm1380
      %v1382 = vsel %vm1381, %v1374, %v1378
      %v1383 = vand.u32 2147483647, %v1314
      %vm1384 = vcmp.eq.f32.partialorder %v1383, 8.507059e+37
      %v1385 = vand.u32 %v1314, 2147483648
      %v1386 = vor.u32 1.1754944e-38, %v1385
      %v1387 = vsel %vm1384, %v1386, %v1382
      %v1388 = vmul.f32 1.0, %v1387
      %v1389 = vrcp.pop %v1315
      %v1390 = vmul.f32 %v1315, %v1389
      %v1391 = vsub.f32 1.0, %v1390
      %v1392 = vmul.f32 %v1389, %v1391
      %v1393 = vadd.f32 %v1389, %v1392
      %vm1394 = vweird.f32 %v1315
      %vm1395 = vweird.f32 %v1389
      %vm1396 = vmor %vm1394, %vm1395
      %v1397 = vsel %vm1396, %v1389, %v1393
      %v1398 = vand.u32 2147483647, %v1315
      %vm1399 = vcmp.eq.f32.partialorder %v1398, 8.507059e+37
      %v1400 = vand.u32 %v1315, 2147483648
      %v1401 = vor.u32 1.1754944e-38, %v1400
      %v1402 = vsel %vm1399, %v1401, %v1397
      %v1403 = vmul.f32 1.0, %v1402
      %v1404 = vrcp.pop %v1316
      %v1405 = vmul.f32 %v1316, %v1404
      %v1406 = vsub.f32 1.0, %v1405
      %v1407 = vmul.f32 %v1404, %v1406
      %v1408 = vadd.f32 %v1404, %v1407
      %vm1409 = vweird.f32 %v1316
      %vm1410 = vweird.f32 %v1404
      %vm1411 = vmor %vm1409, %vm1410
      %v1412 = vsel %vm1411, %v1404, %v1408
      %v1413 = vand.u32 2147483647, %v1316
      %vm1414 = vcmp.eq.f32.partialorder %v1413, 8.507059e+37
      %v1415 = vand.u32 %v1316, 2147483648
      %v1416 = vor.u32 1.1754944e-38, %v1415
      %v1417 = vsel %vm1414, %v1416, %v1412
      %v1418 = vmul.f32 1.0, %v1417
      %v1419 = vrcp.pop %v1317
      %v1420 = vmul.f32 %v1317, %v1419
      %v1421 = vsub.f32 1.0, %v1420
      %v1422 = vmul.f32 %v1419, %v1421
      %v1423 = vadd.f32 %v1419, %v1422
      %vm1424 = vweird.f32 %v1317
      %vm1425 = vweird.f32 %v1419
      %vm1426 = vmor %vm1424, %vm1425
      %v1427 = vsel %vm1426, %v1419, %v1423
      %v1428 = vand.u32 2147483647, %v1317
      %vm1429 = vcmp.eq.f32.partialorder %v1428, 8.507059e+37
      %v1430 = vand.u32 %v1317, 2147483648
      %v1431 = vor.u32 1.1754944e-38, %v1430
      %v1432 = vsel %vm1429, %v1431, %v1427
      %v1433 = vmul.f32 1.0, %v1432
      %v1434 = vrcp.pop %v1318
      %v1435 = vmul.f32 %v1318, %v1434
      %v1436 = vsub.f32 1.0, %v1435
      %v1437 = vmul.f32 %v1434, %v1436
      %v1438 = vadd.f32 %v1434, %v1437
      %vm1439 = vweird.f32 %v1318
      %vm1440 = vweird.f32 %v1434
      %vm1441 = vmor %vm1439, %vm1440
      %v1442 = vsel %vm1441, %v1434, %v1438
      %v1443 = vand.u32 2147483647, %v1318
      %vm1444 = vcmp.eq.f32.partialorder %v1443, 8.507059e+37
      %v1445 = vand.u32 %v1318, 2147483648
      %v1446 = vor.u32 1.1754944e-38, %v1445
      %v1447 = vsel %vm1444, %v1446, %v1442
      %v1448 = vmul.f32 1.0, %v1447
      %v1449 = vrcp.pop %v1319
      %v1450 = vmul.f32 %v1319, %v1449
      %v1451 = vsub.f32 1.0, %v1450
      %v1452 = vmul.f32 %v1449, %v1451
      %v1453 = vadd.f32 %v1449, %v1452
      %vm1454 = vweird.f32 %v1319
      %vm1455 = vweird.f32 %v1449
      %vm1456 = vmor %vm1454, %vm1455
      %v1457 = vsel %vm1456, %v1449, %v1453
      %v1458 = vand.u32 2147483647, %v1319
      %vm1459 = vcmp.eq.f32.partialorder %v1458, 8.507059e+37
      %v1460 = vand.u32 %v1319, 2147483648
      %v1461 = vor.u32 1.1754944e-38, %v1460
      %v1462 = vsel %vm1459, %v1461, %v1457
      %v1463 = vmul.f32 1.0, %v1462
      %v1464 = vrcp.pop %v1320
      %v1465 = vmul.f32 %v1320, %v1464
      %v1466 = vsub.f32 1.0, %v1465
      %v1467 = vmul.f32 %v1464, %v1466
      %v1468 = vadd.f32 %v1464, %v1467
      %vm1469 = vweird.f32 %v1320
      %vm1470 = vweird.f32 %v1464
      %vm1471 = vmor %vm1469, %vm1470
      %v1472 = vsel %vm1471, %v1464, %v1468
      %v1473 = vand.u32 2147483647, %v1320
      %vm1474 = vcmp.eq.f32.partialorder %v1473, 8.507059e+37
      %v1475 = vand.u32 %v1320, 2147483648
      %v1476 = vor.u32 1.1754944e-38, %v1475
      %v1477 = vsel %vm1474, %v1476, %v1472
      %v1478 = vmul.f32 1.0, %v1477
      %v1479 = vrcp.pop %v1321
      %v1480 = vmul.f32 %v1321, %v1479
      %v1481 = vsub.f32 1.0, %v1480
      %v1482 = vmul.f32 %v1479, %v1481
      %v1483 = vadd.f32 %v1479, %v1482
      %vm1484 = vweird.f32 %v1321
      %vm1485 = vweird.f32 %v1479
      %vm1486 = vmor %vm1484, %vm1485
      %v1487 = vsel %vm1486, %v1479, %v1483
      %v1488 = vand.u32 2147483647, %v1321
      %vm1489 = vcmp.eq.f32.partialorder %v1488, 8.507059e+37
      %v1490 = vand.u32 %v1321, 2147483648
      %v1491 = vor.u32 1.1754944e-38, %v1490
      %v1492 = vsel %vm1489, %v1491, %v1487
      %v1493 = vmul.f32 1.0, %v1492
      %v1494 = vrcp.pop %v1322
      %v1495 = vmul.f32 %v1322, %v1494
      %v1496 = vsub.f32 1.0, %v1495
      %v1497 = vmul.f32 %v1494, %v1496
      %v1498 = vadd.f32 %v1494, %v1497
      %vm1499 = vweird.f32 %v1322
      %vm1500 = vweird.f32 %v1494
      %vm1501 = vmor %vm1499, %vm1500
      %v1502 = vsel %vm1501, %v1494, %v1498
      %v1503 = vand.u32 2147483647, %v1322
      %vm1504 = vcmp.eq.f32.partialorder %v1503, 8.507059e+37
      %v1505 = vand.u32 %v1322, 2147483648
      %v1506 = vor.u32 1.1754944e-38, %v1505
      %v1507 = vsel %vm1504, %v1506, %v1502
      %v1508 = vmul.f32 1.0, %v1507
      %v1509 = vrcp.pop %v1323
      %v1510 = vmul.f32 %v1323, %v1509
      %v1511 = vsub.f32 1.0, %v1510
      %v1512 = vmul.f32 %v1509, %v1511
      %v1513 = vadd.f32 %v1509, %v1512
      %vm1514 = vweird.f32 %v1323
      %vm1515 = vweird.f32 %v1509
      %vm1516 = vmor %vm1514, %vm1515
      %v1517 = vsel %vm1516, %v1509, %v1513
      %v1518 = vand.u32 2147483647, %v1323
      %vm1519 = vcmp.eq.f32.partialorder %v1518, 8.507059e+37
      %v1520 = vand.u32 %v1323, 2147483648
      %v1521 = vor.u32 1.1754944e-38, %v1520
      %v1522 = vsel %vm1519, %v1521, %v1517
      %v1523 = vmul.f32 1.0, %v1522
      %v1524 = vrcp.pop %v1324
      %v1525 = vmul.f32 %v1324, %v1524
      %v1526 = vsub.f32 1.0, %v1525
      %v1527 = vmul.f32 %v1524, %v1526
      %v1528 = vadd.f32 %v1524, %v1527
      %vm1529 = vweird.f32 %v1324
      %vm1530 = vweird.f32 %v1524
      %vm1531 = vmor %vm1529, %vm1530
      %v1532 = vsel %vm1531, %v1524, %v1528
      %v1533 = vand.u32 2147483647, %v1324
      %vm1534 = vcmp.eq.f32.partialorder %v1533, 8.507059e+37
      %v1535 = vand.u32 %v1324, 2147483648
      %v1536 = vor.u32 1.1754944e-38, %v1535
      %v1537 = vsel %vm1534, %v1536, %v1532
      %v1538 = vmul.f32 1.0, %v1537
      %v1539 = vrcp.pop %v1325
      %v1540 = vmul.f32 %v1325, %v1539
      %v1541 = vsub.f32 1.0, %v1540
      %v1542 = vmul.f32 %v1539, %v1541
      %v1543 = vadd.f32 %v1539, %v1542
      %vm1544 = vweird.f32 %v1325
      %vm1545 = vweird.f32 %v1539
      %vm1546 = vmor %vm1544, %vm1545
      %v1547 = vsel %vm1546, %v1539, %v1543
      %v1548 = vand.u32 2147483647, %v1325
      %vm1549 = vcmp.eq.f32.partialorder %v1548, 8.507059e+37
      %v1550 = vand.u32 %v1325, 2147483648
      %v1551 = vor.u32 1.1754944e-38, %v1550
      %v1552 = vsel %vm1549, %v1551, %v1547
      %v1553 = vmul.f32 1.0, %v1552
      %v1554 = vrcp.pop %v1326
      %v1555 = vmul.f32 %v1326, %v1554
      %v1556 = vsub.f32 1.0, %v1555
      %v1557 = vmul.f32 %v1554, %v1556
      %v1558 = vadd.f32 %v1554, %v1557
      %vm1559 = vweird.f32 %v1326
      %vm1560 = vweird.f32 %v1554
      %vm1561 = vmor %vm1559, %vm1560
      %v1562 = vsel %vm1561, %v1554, %v1558
      %v1563 = vand.u32 2147483647, %v1326
      %vm1564 = vcmp.eq.f32.partialorder %v1563, 8.507059e+37
      %v1565 = vand.u32 %v1326, 2147483648
      %v1566 = vor.u32 1.1754944e-38, %v1565
      %v1567 = vsel %vm1564, %v1566, %v1562
      %v1568 = vmul.f32 1.0, %v1567
      %v1569 = vrcp.pop %v1327
      %v1570 = vmul.f32 %v1327, %v1569
      %v1571 = vsub.f32 1.0, %v1570
      %v1572 = vmul.f32 %v1569, %v1571
      %v1573 = vadd.f32 %v1569, %v1572
      %vm1574 = vweird.f32 %v1327
      %vm1575 = vweird.f32 %v1569
      %vm1576 = vmor %vm1574, %vm1575
      %v1577 = vsel %vm1576, %v1569, %v1573
      %v1578 = vand.u32 2147483647, %v1327
      %vm1579 = vcmp.eq.f32.partialorder %v1578, 8.507059e+37
      %v1580 = vand.u32 %v1327, 2147483648
      %v1581 = vor.u32 1.1754944e-38, %v1580
      %v1582 = vsel %vm1579, %v1581, %v1577
      %v1583 = vmul.f32 1.0, %v1582
      %v1584 = vrcp.pop %v1328
      %v1585 = vmul.f32 %v1328, %v1584
      %v1586 = vsub.f32 1.0, %v1585
      %v1587 = vmul.f32 %v1584, %v1586
      %v1588 = vadd.f32 %v1584, %v1587
      %vm1589 = vweird.f32 %v1328
      %vm1590 = vweird.f32 %v1584
      %vm1591 = vmor %vm1589, %vm1590
      %v1592 = vsel %vm1591, %v1584, %v1588
      %v1593 = vand.u32 2147483647, %v1328
      %vm1594 = vcmp.eq.f32.partialorder %v1593, 8.507059e+37
      %v1595 = vand.u32 %v1328, 2147483648
      %v1596 = vor.u32 1.1754944e-38, %v1595
      %v1597 = vsel %vm1594, %v1596, %v1592
      %v1598 = vmul.f32 1.0, %v1597
      %v1599 = vrcp.pop %v1329
      %v1600 = vmul.f32 %v1329, %v1599
      %v1601 = vsub.f32 1.0, %v1600
      %v1602 = vmul.f32 %v1599, %v1601
      %v1603 = vadd.f32 %v1599, %v1602
      %vm1604 = vweird.f32 %v1329
      %vm1605 = vweird.f32 %v1599
      %vm1606 = vmor %vm1604, %vm1605
      %v1607 = vsel %vm1606, %v1599, %v1603
      %v1608 = vand.u32 2147483647, %v1329
      %vm1609 = vcmp.eq.f32.partialorder %v1608, 8.507059e+37
      %v1610 = vand.u32 %v1329, 2147483648
      %v1611 = vor.u32 1.1754944e-38, %v1610
      %v1612 = vsel %vm1609, %v1611, %v1607
      %v1613 = vmul.f32 1.0, %v1612
      %v1614 = vrcp.pop %v1330
      %v1615 = vmul.f32 %v1330, %v1614
      %v1616 = vsub.f32 1.0, %v1615
      %v1617 = vmul.f32 %v1614, %v1616
      %v1618 = vadd.f32 %v1614, %v1617
      %vm1619 = vweird.f32 %v1330
      %vm1620 = vweird.f32 %v1614
      %vm1621 = vmor %vm1619, %vm1620
      %v1622 = vsel %vm1621, %v1614, %v1618
      %v1623 = vand.u32 2147483647, %v1330
      %vm1624 = vcmp.eq.f32.partialorder %v1623, 8.507059e+37
      %v1625 = vand.u32 %v1330, 2147483648
      %v1626 = vor.u32 1.1754944e-38, %v1625
      %v1627 = vsel %vm1624, %v1626, %v1622
      %v1628 = vmul.f32 1.0, %v1627
      %v1629 = vrcp.pop %v1331
      %v1630 = vmul.f32 %v1331, %v1629
      %v1631 = vsub.f32 1.0, %v1630
      %v1632 = vmul.f32 %v1629, %v1631
      %v1633 = vadd.f32 %v1629, %v1632
      %vm1634 = vweird.f32 %v1331
      %vm1635 = vweird.f32 %v1629
      %vm1636 = vmor %vm1634, %vm1635
      %v1637 = vsel %vm1636, %v1629, %v1633
      %v1638 = vand.u32 2147483647, %v1331
      %vm1639 = vcmp.eq.f32.partialorder %v1638, 8.507059e+37
      %v1640 = vand.u32 %v1331, 2147483648
      %v1641 = vor.u32 1.1754944e-38, %v1640
      %v1642 = vsel %vm1639, %v1641, %v1637
      %v1643 = vmul.f32 1.0, %v1642
      %v1644 = vrcp.pop %v1332
      %v1645 = vmul.f32 %v1332, %v1644
      %v1646 = vsub.f32 1.0, %v1645
      %v1647 = vmul.f32 %v1644, %v1646
      %v1648 = vadd.f32 %v1644, %v1647
      %vm1649 = vweird.f32 %v1332
      %vm1650 = vweird.f32 %v1644
      %vm1651 = vmor %vm1649, %vm1650
      %v1652 = vsel %vm1651, %v1644, %v1648
      %v1653 = vand.u32 2147483647, %v1332
      %vm1654 = vcmp.eq.f32.partialorder %v1653, 8.507059e+37
      %v1655 = vand.u32 %v1332, 2147483648
      %v1656 = vor.u32 1.1754944e-38, %v1655
      %v1657 = vsel %vm1654, %v1656, %v1652
      %v1658 = vmul.f32 1.0, %v1657
      %v1659 = vrcp.pop %v1333
      %v1660 = vmul.f32 %v1333, %v1659
      %v1661 = vsub.f32 1.0, %v1660
      %v1662 = vmul.f32 %v1659, %v1661
      %v1663 = vadd.f32 %v1659, %v1662
      %vm1664 = vweird.f32 %v1333
      %vm1665 = vweird.f32 %v1659
      %vm1666 = vmor %vm1664, %vm1665
      %v1667 = vsel %vm1666, %v1659, %v1663
      %v1668 = vand.u32 2147483647, %v1333
      %vm1669 = vcmp.eq.f32.partialorder %v1668, 8.507059e+37
      %v1670 = vand.u32 %v1333, 2147483648
      %v1671 = vor.u32 1.1754944e-38, %v1670
      %v1672 = vsel %vm1669, %v1671, %v1667
      %v1673 = vmul.f32 1.0, %v1672
      %v1674 = vrcp.pop %v1334
      %v1675 = vmul.f32 %v1334, %v1674
      %v1676 = vsub.f32 1.0, %v1675
      %v1677 = vmul.f32 %v1674, %v1676
      %v1678 = vadd.f32 %v1674, %v1677
      %vm1679 = vweird.f32 %v1334
      %vm1680 = vweird.f32 %v1674
      %vm1681 = vmor %vm1679, %vm1680
      %v1682 = vsel %vm1681, %v1674, %v1678
      %v1683 = vand.u32 2147483647, %v1334
      %vm1684 = vcmp.eq.f32.partialorder %v1683, 8.507059e+37
      %v1685 = vand.u32 %v1334, 2147483648
      %v1686 = vor.u32 1.1754944e-38, %v1685
      %v1687 = vsel %vm1684, %v1686, %v1682
      %v1688 = vmul.f32 1.0, %v1687
      %v1689 = vrcp.pop %v1335
      %v1690 = vmul.f32 %v1335, %v1689
      %v1691 = vsub.f32 1.0, %v1690
      %v1692 = vmul.f32 %v1689, %v1691
      %v1693 = vadd.f32 %v1689, %v1692
      %vm1694 = vweird.f32 %v1335
      %vm1695 = vweird.f32 %v1689
      %vm1696 = vmor %vm1694, %vm1695
      %v1697 = vsel %vm1696, %v1689, %v1693
      %v1698 = vand.u32 2147483647, %v1335
      %vm1699 = vcmp.eq.f32.partialorder %v1698, 8.507059e+37
      %v1700 = vand.u32 %v1335, 2147483648
      %v1701 = vor.u32 1.1754944e-38, %v1700
      %v1702 = vsel %vm1699, %v1701, %v1697
      %v1703 = vmul.f32 1.0, %v1702
      %v1704 = vrcp.pop %v1336
      %v1705 = vmul.f32 %v1336, %v1704
      %v1706 = vsub.f32 1.0, %v1705
      %v1707 = vmul.f32 %v1704, %v1706
      %v1708 = vadd.f32 %v1704, %v1707
      %vm1709 = vweird.f32 %v1336
      %vm1710 = vweird.f32 %v1704
      %vm1711 = vmor %vm1709, %vm1710
      %v1712 = vsel %vm1711, %v1704, %v1708
      %v1713 = vand.u32 2147483647, %v1336
      %vm1714 = vcmp.eq.f32.partialorder %v1713, 8.507059e+37
      %v1715 = vand.u32 %v1336, 2147483648
      %v1716 = vor.u32 1.1754944e-38, %v1715
      %v1717 = vsel %vm1714, %v1716, %v1712
      %v1718 = vmul.f32 1.0, %v1717
      %v1719 = vrcp.pop %v1337
      %v1720 = vmul.f32 %v1337, %v1719
      %v1721 = vsub.f32 1.0, %v1720
      %v1722 = vmul.f32 %v1719, %v1721
      %v1723 = vadd.f32 %v1719, %v1722
      %vm1724 = vweird.f32 %v1337
      %vm1725 = vweird.f32 %v1719
      %vm1726 = vmor %vm1724, %vm1725
      %v1727 = vsel %vm1726, %v1719, %v1723
      %v1728 = vand.u32 2147483647, %v1337
      %vm1729 = vcmp.eq.f32.partialorder %v1728, 8.507059e+37
      %v1730 = vand.u32 %v1337, 2147483648
      %v1731 = vor.u32 1.1754944e-38, %v1730
      %v1732 = vsel %vm1729, %v1731, %v1727
      %v1733 = vmul.f32 1.0, %v1732
      %v1734 = vrcp.pop %v1338
      %v1735 = vmul.f32 %v1338, %v1734
      %v1736 = vsub.f32 1.0, %v1735
      %v1737 = vmul.f32 %v1734, %v1736
      %v1738 = vadd.f32 %v1734, %v1737
      %vm1739 = vweird.f32 %v1338
      %vm1740 = vweird.f32 %v1734
      %vm1741 = vmor %vm1739, %vm1740
      %v1742 = vsel %vm1741, %v1734, %v1738
      %v1743 = vand.u32 2147483647, %v1338
      %vm1744 = vcmp.eq.f32.partialorder %v1743, 8.507059e+37
      %v1745 = vand.u32 %v1338, 2147483648
      %v1746 = vor.u32 1.1754944e-38, %v1745
      %v1747 = vsel %vm1744, %v1746, %v1742
      %v1748 = vmul.f32 1.0, %v1747
      %v1749 = vrcp.pop %v1339
      %v1750 = vmul.f32 %v1339, %v1749
      %v1751 = vsub.f32 1.0, %v1750
      %v1752 = vmul.f32 %v1749, %v1751
      %v1753 = vadd.f32 %v1749, %v1752
      %vm1754 = vweird.f32 %v1339
      %vm1755 = vweird.f32 %v1749
      %vm1756 = vmor %vm1754, %vm1755
      %v1757 = vsel %vm1756, %v1749, %v1753
      %v1758 = vand.u32 2147483647, %v1339
      %vm1759 = vcmp.eq.f32.partialorder %v1758, 8.507059e+37
      %v1760 = vand.u32 %v1339, 2147483648
      %v1761 = vor.u32 1.1754944e-38, %v1760
      %v1762 = vsel %vm1759, %v1761, %v1757
      %v1763 = vmul.f32 1.0, %v1762
      %v1764 = vrcp.pop %v1340
      %v1765 = vmul.f32 %v1340, %v1764
      %v1766 = vsub.f32 1.0, %v1765
      %v1767 = vmul.f32 %v1764, %v1766
      %v1768 = vadd.f32 %v1764, %v1767
      %vm1769 = vweird.f32 %v1340
      %vm1770 = vweird.f32 %v1764
      %vm1771 = vmor %vm1769, %vm1770
      %v1772 = vsel %vm1771, %v1764, %v1768
      %v1773 = vand.u32 2147483647, %v1340
      %vm1774 = vcmp.eq.f32.partialorder %v1773, 8.507059e+37
      %v1775 = vand.u32 %v1340, 2147483648
      %v1776 = vor.u32 1.1754944e-38, %v1775
      %v1777 = vsel %vm1774, %v1776, %v1772
      %v1778 = vmul.f32 1.0, %v1777
      %v1779 = vrcp.pop %v1341
      %v1780 = vmul.f32 %v1341, %v1779
      %v1781 = vsub.f32 1.0, %v1780
      %v1782 = vmul.f32 %v1779, %v1781
      %v1783 = vadd.f32 %v1779, %v1782
      %vm1784 = vweird.f32 %v1341
      %vm1785 = vweird.f32 %v1779
      %vm1786 = vmor %vm1784, %vm1785
      %v1787 = vsel %vm1786, %v1779, %v1783
      %v1788 = vand.u32 2147483647, %v1341
      %vm1789 = vcmp.eq.f32.partialorder %v1788, 8.507059e+37
      %v1790 = vand.u32 %v1341, 2147483648
      %v1791 = vor.u32 1.1754944e-38, %v1790
      %v1792 = vsel %vm1789, %v1791, %v1787
      %v1793 = vmul.f32 1.0, %v1792
      %v1794 = vrcp.pop %v1342
      %v1795 = vmul.f32 %v1342, %v1794
      %v1796 = vsub.f32 1.0, %v1795
      %v1797 = vmul.f32 %v1794, %v1796
      %v1798 = vadd.f32 %v1794, %v1797
      %vm1799 = vweird.f32 %v1342
      %vm1800 = vweird.f32 %v1794
      %vm1801 = vmor %vm1799, %vm1800
      %v1802 = vsel %vm1801, %v1794, %v1798
      %v1803 = vand.u32 2147483647, %v1342
      %vm1804 = vcmp.eq.f32.partialorder %v1803, 8.507059e+37
      %v1805 = vand.u32 %v1342, 2147483648
      %v1806 = vor.u32 1.1754944e-38, %v1805
      %v1807 = vsel %vm1804, %v1806, %v1802
      %v1808 = vmul.f32 1.0, %v1807
      %v1809 = vrcp.pop %v1343
      %v1810 = vmul.f32 %v1343, %v1809
      %v1811 = vsub.f32 1.0, %v1810
      %v1812 = vmul.f32 %v1809, %v1811
      %v1813 = vadd.f32 %v1809, %v1812
      %vm1814 = vweird.f32 %v1343
      %vm1815 = vweird.f32 %v1809
      %vm1816 = vmor %vm1814, %vm1815
      %v1817 = vsel %vm1816, %v1809, %v1813
      %v1818 = vand.u32 2147483647, %v1343
      %vm1819 = vcmp.eq.f32.partialorder %v1818, 8.507059e+37
      %v1820 = vand.u32 %v1343, 2147483648
      %v1821 = vor.u32 1.1754944e-38, %v1820
      %v1822 = vsel %vm1819, %v1821, %v1817
      %v1823 = vmul.f32 1.0, %v1822
      %v1824 = vmul.f32 %v1184, %v1358
      %v1825 = vmul.f32 %v1185, %v1373
      %v1826 = vmul.f32 %v1186, %v1388
      %v1827 = vmul.f32 %v1187, %v1403
      %v1828 = vmul.f32 %v1188, %v1418
      %v1829 = vmul.f32 %v1189, %v1433
      %v1830 = vmul.f32 %v1190, %v1448
      %v1831 = vmul.f32 %v1191, %v1463
      %v1832 = vmul.f32 %v1192, %v1478
      %v1833 = vmul.f32 %v1193, %v1493
      %v1834 = vmul.f32 %v1194, %v1508
      %v1835 = vmul.f32 %v1195, %v1523
      %v1836 = vmul.f32 %v1196, %v1538
      %v1837 = vmul.f32 %v1197, %v1553
      %v1838 = vmul.f32 %v1198, %v1568
      %v1839 = vmul.f32 %v1199, %v1583
      %v1840 = vmul.f32 %v1200, %v1598
      %v1841 = vmul.f32 %v1201, %v1613
      %v1842 = vmul.f32 %v1202, %v1628
      %v1843 = vmul.f32 %v1203, %v1643
      %v1844 = vmul.f32 %v1204, %v1658
      %v1845 = vmul.f32 %v1205, %v1673
      %v1846 = vmul.f32 %v1206, %v1688
      %v1847 = vmul.f32 %v1207, %v1703
      %v1848 = vmul.f32 %v1208, %v1718
      %v1849 = vmul.f32 %v1209, %v1733
      %v1850 = vmul.f32 %v1210, %v1748
      %v1851 = vmul.f32 %v1211, %v1763
      %v1852 = vmul.f32 %v1212, %v1778
      %v1853 = vmul.f32 %v1213, %v1793
      %v1854 = vmul.f32 %v1214, %v1808
      %v1855 = vmul.f32 %v1215, %v1823
      %v1856 = vld [vmem:[%s8] sm:$0x1]
      %v1857 = vpack.c.bf16 %v1825, %v1824
      %v1858 = vpack.c.bf16 %v1827, %v1826
      %v1859 = vpack.c.bf16 %v1829, %v1828
      %v1860 = vpack.c.bf16 %v1831, %v1830
      %v1861 = vpack.c.bf16 %v1833, %v1832
      %v1862 = vpack.c.bf16 %v1835, %v1834
      %v1863 = vpack.c.bf16 %v1837, %v1836
      %v1864 = vpack.c.bf16 %v1839, %v1838
      %v1865 = vpack.c.bf16 %v1841, %v1840
      %v1866 = vpack.c.bf16 %v1843, %v1842
      %v1867 = vpack.c.bf16 %v1845, %v1844
      %v1868 = vpack.c.bf16 %v1847, %v1846
      %v1869 = vpack.c.bf16 %v1849, %v1848
      %v1870 = vpack.c.bf16 %v1851, %v1850
      %v1871 = vpack.c.bf16 %v1853, %v1852
      %v1872 = vpack.c.bf16 %v1855, %v1854
      %v1873 = vld [vmem:[#allocation5] sm:$0x1]
      %1875 = vset.pattern.permute.xlu0 0
      %1876 = vperm.xlu0 %1875, %v1873
      %v1877 = vpop.permute.xlu0 %1876
      %v1879 = vperm.slane %v1877, 0
      %v1881 = vsel %vm937, %v1856, 0
      %v1884 = vsel %vm937, %v1857, 0
      %v1887 = vsel %vm937, %v1858, 0
      %v1890 = vsel %vm937, %v1859, 0
      %v1893 = vsel %vm937, %v1860, 0
      %v1896 = vsel %vm937, %v1861, 0
      %v1899 = vsel %vm937, %v1862, 0
      %v1902 = vsel %vm937, %v1863, 0
      %v1905 = vsel %vm937, %v1864, 0
      %v1908 = vsel %vm937, %v1865, 0
      %v1911 = vsel %vm937, %v1866, 0
      %v1914 = vsel %vm937, %v1867, 0
      %v1917 = vsel %vm937, %v1868, 0
      %v1920 = vsel %vm937, %v1869, 0
      %v1923 = vsel %vm937, %v1870, 0
      %v1926 = vsel %vm937, %v1871, 0
      %v1929 = vsel %vm937, %v1872, 0
      %1931 = vmatpush.bf16.xpose.msra.mxu0 %v1905
      %1932 = vmatpush.bf16.xpose.msra.mxu0 %v1902
      %1933 = vmatpush.bf16.xpose.msra.mxu0 %v1899
      %1934 = vmatpush.bf16.xpose.msra.mxu0 %v1896
      %1935 = vmatpush.bf16.xpose.msra.mxu0 %v1893
      %1936 = vmatpush.bf16.xpose.msra.mxu0 %v1890
      %1937 = vmatpush.bf16.xpose.msra.mxu0 %v1887
      %1938 = vmatpush.bf16.xpose.msra.mxu0 %v1884
      %1939 = vmatmul.bf16.gmra.mxu0 %v1881
      %v1940 = vpop.f32.mrf.mxu0
      %v1941 = vadd.f32 %v1879, %v1940
      %v1942 = vpop.f32.mrf.mxu0
      %1943 = vdwg.mxu0
      %1944 = vmatpush.bf16.xpose.msra.mxu0 %v1929
      %1945 = vmatpush.bf16.xpose.msra.mxu0 %v1926
      %1946 = vmatpush.bf16.xpose.msra.mxu0 %v1923
      %1947 = vmatpush.bf16.xpose.msra.mxu0 %v1920
      %1948 = vmatpush.bf16.xpose.msra.mxu0 %v1917
      %1949 = vmatpush.bf16.xpose.msra.mxu0 %v1914
      %1950 = vmatpush.bf16.xpose.msra.mxu0 %v1911
      %1951 = vmatpush.bf16.xpose.msra.mxu0 %v1908
      %1952 = vmatmul.bf16.gmra.mxu0 %v1881
      %v1953 = vpop.f32.mrf.mxu0
      %v1954 = vadd.f32 %v1879, %v1953
      %v1955 = vpop.f32.mrf.mxu0
      %1956 = vdwg.mxu0
      %v1957 = vld [vmem:[%s440] sm:$0x3]
      %v1958 = vperm.slane %v1957, 0
      %v1959 = vperm.slane %v1957, 1
      %vm1960 = vcmp.eq.s32.totalorder %v1958, %v707
      %vm1961 = vcmp.eq.s32.totalorder %v1959, %v707
      %v1962 = vperm.slane %v1941, 0
      %v1963 = vperm.slane %v1954, 0
      %v1964 = vsel %vm1960, %v1962, -1e+30
      %v1965 = vsel %vm1961, %v1963, -1e+30
      %v1966 = vld [vmem:[#allocation2] sm:$0xff]
      %v1967 = vmax.f32 %v1964, %v1965
      %1968 = vmax.xlane.f32.xlu0 %v1967
      %v1969 = vpop.xlane.xlu0 %1968
      %v1970 = vmax.f32 %v1966, %v1969
      %v1971 = vsub.f32 %v1966, %v1970
      %v1972 = vmul.f32 %v1971, 1.442695
      %v1973 = vpow.pop %v1972
      %1975 = vset.pattern.permute.xlu0 0
      %1976 = vperm.xlu0 %1975, %v1970
      %v1977 = vpop.permute.xlu0 %1976
      %v1979 = vsub.f32 %v1964, %v1977
      %v1980 = vsub.f32 %v1965, %v1977
      %v1981 = vmul.f32 %v1979, 1.442695
      %v1982 = vpow.pop %v1981
      %v1983 = vmul.f32 %v1980, 1.442695
      %v1984 = vpow.pop %v1983
      %v1985 = vsel %vm1960, %v1982, 0.0
      %v1986 = vsel %vm1961, %v1984, 0.0
      %v1987 = vld [vmem:[#allocation3] sm:$0xff]
      %v1988 = vmul.f32 %v1973, %v1987
      %v1989 = vadd.f32 %v1985, %v1986
      %1990 = vadd.xlane.f32.xlu0 %v1989
      %v1991 = vpop.xlane.xlu0 %1990
      %v1992 = vadd.f32 %v1988, %v1991
      %vm1993 = vcmask 7168
      %1994 = vst.msk [vmem:[#allocation3] sm:$0xff] %vm1993, %v1992
      %v1995 = vld [vmem:[#allocation4] sm:$0xff]
      %1997 = vset.pattern.permute.xlu0 0
      %1998 = vperm.xlu0 %1997, %v1973
      %v1999 = vpop.permute.xlu0 %1998
      %v2001 = vmul.f32 %v1999, %v1995
      %v2002 = vpack.c.bf16 %v1985, %v1985
      %v2003 = vpack.c.bf16 %v1986, %v1986
      %2004 = vmatpush.bf16.msra.mxu0 %v908
      %2005 = vmatpush.bf16.msra.mxu0 %v907
      %2006 = vmatpush.bf16.msra.mxu0 %v906
      %2007 = vmatpush.bf16.msra.mxu0 %v905
      %2008 = vmatpush.bf16.msra.mxu0 %v904
      %2009 = vmatpush.bf16.msra.mxu0 %v903
      %2010 = vmatpush.bf16.msra.mxu0 %v902
      %2011 = vmatpush.bf16.msra.mxu0 %v901
      %2012 = vmatmul.bf16.gmra.mxu0 %v2002
      %v2013 = vpop.f32.mrf.mxu0
      %v2014 = vadd.f32 0.0, %v2013
      %v2015 = vpop.f32.mrf.mxu0
      %2016 = vdwg.mxu0
      %2017 = vmatpush.bf16.msra.mxu0 %v916
      %2018 = vmatpush.bf16.msra.mxu0 %v915
      %2019 = vmatpush.bf16.msra.mxu0 %v914
      %2020 = vmatpush.bf16.msra.mxu0 %v913
      %2021 = vmatpush.bf16.msra.mxu0 %v912
      %2022 = vmatpush.bf16.msra.mxu0 %v911
      %2023 = vmatpush.bf16.msra.mxu0 %v910
      %2024 = vmatpush.bf16.msra.mxu0 %v909
      %2025 = vmatmul.bf16.gmra.mxu0 %v2003
      %v2026 = vpop.f32.mrf.mxu0
      %v2027 = vadd.f32 %v2014, %v2026
      %v2028 = vpop.f32.mrf.mxu0
      %2029 = vdwg.mxu0
      %v2030 = vadd.f32 %v2001, %v2027
      %2031 = vst.msk [vmem:[#allocation4] sm:$0xff] %vm937, %v2030
      %2032 = vst.msk [vmem:[#allocation2] sm:$0xff] %vm1993, %v1970
      %p2033 = scmp.eq.s32.totalorder %s25, 1
      // Predicated region
      $region73: #{tpu_custom_call.1} parent=67 // pred_check
        %p2034 = pneg %p2033
      $region74: #{tpu_custom_call.1} parent=67 // pred_check_branch
        %2036 = sbr.rel (%p2034) target = $region76
      $region75: #{tpu_custom_call.1} parent=67 // pred_region
        %v2037 = vld [vmem:[#allocation3] sm:$0xff]
        %v2038 = vmax.f32 %v2037, 1e-30
        %v2039 = vrcp.pop %v2038
        %v2040 = vmul.f32 %v2038, %v2039
        %v2041 = vsub.f32 1.0, %v2040
        %v2042 = vmul.f32 %v2039, %v2041
        %v2043 = vadd.f32 %v2039, %v2042
        %vm2044 = vweird.f32 %v2038
        %vm2045 = vweird.f32 %v2039
        %vm2046 = vmor %vm2044, %vm2045
        %v2047 = vsel %vm2046, %v2039, %v2043
        %v2048 = vand.u32 2147483647, %v2038
        %vm2049 = vcmp.eq.f32.partialorder %v2048, 8.507059e+37
        %v2050 = vand.u32 %v2038, 2147483648
        %v2051 = vor.u32 1.1754944e-38, %v2050
        %v2052 = vsel %vm2049, %v2051, %v2047
        %v2053 = vmul.f32 1.0, %v2052
        %vm2054 = vcmp.gt.f32.partialorder %v2037, 0.0
        %v2055 = vsel %vm2054, %v2053, 0.0
        %v2056 = vld [vmem:[#allocation4] sm:$0xff]
        %2058 = vset.pattern.permute.xlu0 0
        %2059 = vperm.xlu0 %2058, %v2055
        %v2060 = vpop.permute.xlu0 %2059
        %v2062 = vmul.f32 %v2056, %v2060
        %v2063 = vpack.c.bf16 %v2062, %v2062
        %v2064 = vld [vmem:[%s10] sm:$0xf]
        %v2065 = vld [vmem:[%s10 + $0x4] sm:$0xf]
        %v2066 = vld [vmem:[%s10 + $0x8] sm:$0xf]
        %v2067 = vld [vmem:[%s10 + $0xc] sm:$0xf]
        %v2068 = vld [vmem:[%s11] sm:$0x1]
        %v2070 = vperm.slane %v2068, 0
        %v2076 = vunpack.c.l.b16 %v2064
        %v2077 = vunpack.c.l.b16 %v2065
        %v2078 = vunpack.c.l.b16 %v2066
        %v2079 = vunpack.c.l.b16 %v2067
        %v2080 = vpack.c.b16 %v2077, %v2076
        %v2081 = vpack.c.b16 %v2079, %v2078
        %v2085 = vsel %vm937, %v2063, 0
        %2087 = vmatpush.bf16.msra.mxu0 0
        %2088 = vmatpush.bf16.msra.mxu0 0
        %2089 = vmatpush.bf16.msra.mxu0 0
        %2090 = vmatpush.bf16.msra.mxu0 0
        %2091 = vmatpush.bf16.msra.mxu0 0
        %2092 = vmatpush.bf16.msra.mxu0 0
        %2093 = vmatpush.bf16.msra.mxu0 %v2081
        %2094 = vmatpush.bf16.msra.mxu0 %v2080
        %2095 = vmatmul.bf16.gmra.mxu0 %v2085
        %v2096 = vpop.f32.mrf.mxu0
        %v2097 = vadd.f32 %v2070, %v2096
        %v2098 = vpop.f32.mrf.mxu0
        %2099 = vdwg.mxu0
        %vm2100 = vcmask 31744
        %2101 = vst.msk [vmem:[%s12] sm:$0xff] %vm2100, %v2097
      $region76: #{tpu_custom_call.1} parent=67 // pred_fallthru
        _
      // Predicated region
      $region77: #{tpu_custom_call.1} parent=67 // pred_check
        %p2102 = pneg %p300
      $region78: #{tpu_custom_call.1} parent=67 // pred_check_branch
        %2104 = sbr.rel (%p2102) target = $region80
      $region79: #{tpu_custom_call.1} parent=67 // pred_region
        _
      $region80: #{tpu_custom_call.1} parent=67 // pred_fallthru
        _
      // Predicated region
      $region81: #{tpu_custom_call.1} parent=67 // pred_check
        %p2105 = pneg %p300
      $region82: #{tpu_custom_call.1} parent=67 // pred_check_branch
        %2107 = sbr.rel (%p2105) target = $region84
      $region83: #{tpu_custom_call.1} parent=67 // pred_region
        _
      $region84: #{tpu_custom_call.1} parent=67 // pred_fallthru
        _
    $region68: #{tpu_custom_call.1} parent=5 // pred_fallthru
      _
    %p2108 = scmp.le.s32.totalorder 2, %s20
    // Predicated region
    $region85: #{tpu_custom_call.1} parent=5 // pred_check
      %p2109 = pneg %p2108
    $region86: #{tpu_custom_call.1} parent=5 // pred_check_branch
      %2111 = sbr.rel (%p2109) target = $region88
    $region87: #{tpu_custom_call.1} parent=5 // pred_region
      %s2112 = ssub.s32 %s20, 2
    $region88: #{tpu_custom_call.1} parent=5 // pred_fallthru
      _
  $region6: #{tpu_custom_call.1} parent=0 // loop_footer
    %s24 = sadd.s32 1, %s20
  $region7: #{tpu_custom_call.1} parent=0 // loop_footer_branch
    %19 = sbr.rel target = $region3
  $region8: #{tpu_custom_call.1} parent=0 // loop_exit
    _

</llo_original>
